<compile_context>
chip_gen: v7x
topology: tpu7x:2x2x1
jax: 0.10.0
libtpu: 0.0.40
codegen_flags: <defaults>
</compile_context>

<pallas_src>
import functools

import jax
import jax.numpy as jnp
from jax.experimental import pallas as pl
from jax.experimental.pallas import tpu as pltpu

IN_FEATURES = 5547
HIDDEN = 25
OUT_FEATURES = 5


def _mlp_kernel(x_ref, w1_ref, b1_ref, w2_ref, b2_ref, o_ref):
    # Linear 1 (MXU matmul, f32 accumulation) + bias + ReLU (VPU).
    h = jnp.dot(x_ref[...], w1_ref[...], preferred_element_type=jnp.float32)
    h = jnp.maximum(h + b1_ref[...], 0.0)          # (tb,25) + (1,25) broadcast
    # Linear 2.
    y = jnp.dot(h, w2_ref[...], preferred_element_type=jnp.float32)
    o_ref[...] = (y + b2_ref[...]).astype(o_ref.dtype)


def _round_up(n, m):
    return ((n + m - 1) // m) * m


@functools.cache
def _hw_config():
    """(max_batch_tile, vmem_limit_bytes) chosen from the local TPU generation."""
    try:
        vmem_bytes = pltpu.get_tpu_info().vmem_capacity_bytes
    except Exception:
        vmem_bytes = 64 * 1024 * 1024          # unknown -> conservative (v7x-sized)
    if vmem_bytes >= 96 * 1024 * 1024:         # v5e / v6e: 128 MiB VMEM per core
        # 2 x-buffers (~45 MiB at TB=1024) + resident weights + slack.
        return 1024, 72 * 1024 * 1024
    # v7x: 64 MiB VMEM per core -> 2 x-buffers (~23 MiB at TB=512) + slack.
    return 512, 44 * 1024 * 1024


@jax.jit
def model_gnome_forward(x, w1, b1, w2, b2):
    """x: (B, 5547) f32; w1: (5547, 25); b1: (1, 25); w2: (25, 5); b2: (1, 5).

    Weights must be supplied pre-transposed to (in, out) layout (torch stores
    (out, in)); do that transpose once at parameter-load time, not per call.
    """
    B = x.shape[0]
    max_tb, vmem_limit = _hw_config()

    if B <= max_tb:
        # Single tile covering the whole batch; block dim == full array dim,
        # so no (8,128) constraint and no padding at all.
        tb, num_tiles = B, 1
    else:
        num_tiles = pl.cdiv(B, max_tb)
        tb = _round_up(pl.cdiv(B, num_tiles), 8)   # <= max_tb; waste < 8 rows/tile
    b_total = num_tiles * tb

    if b_total != B:
        x = jnp.pad(x, ((0, b_total - B), (0, 0)))

    flops = 2 * B * IN_FEATURES * HIDDEN + 2 * B * HIDDEN * OUT_FEATURES
    bytes_accessed = (
        B * IN_FEATURES * 4                        # stream x (dominant term)
        + IN_FEATURES * HIDDEN * 4                 # w1 (read once, resident)
        + HIDDEN * OUT_FEATURES * 4                # w2
        + (HIDDEN + OUT_FEATURES) * 4              # biases
        + B * OUT_FEATURES * 4                     # output
    )

    out = pl.pallas_call(
        _mlp_kernel,
        out_shape=jax.ShapeDtypeStruct((b_total, OUT_FEATURES), x.dtype),
        grid=(num_tiles,),
        in_specs=[
            # x: tiled over batch only -> double-buffered DMA of the true
            # 5547-wide rows (no padded copy ever written to HBM).
            pl.BlockSpec((tb, IN_FEATURES), lambda i: (i, 0)),
            # Weights / biases: constant index maps -> fetched once, then
            # resident in VMEM for every grid step.
            pl.BlockSpec((IN_FEATURES, HIDDEN), lambda i: (0, 0)),
            pl.BlockSpec((1, HIDDEN), lambda i: (0, 0)),
            pl.BlockSpec((HIDDEN, OUT_FEATURES), lambda i: (0, 0)),
            pl.BlockSpec((1, OUT_FEATURES), lambda i: (0, 0)),
        ],
        out_specs=pl.BlockSpec((tb, OUT_FEATURES), lambda i: (i, 0)),
        compiler_params=pltpu.CompilerParams(
            # Independent batch tiles: eligible for megacore sharding so both
            # v7x TensorCores issue DMAs (no effect on single-TC v5e/v6e).
            dimension_semantics=(pltpu.PARALLEL,),
            vmem_limit_bytes=vmem_limit,
        ),
        cost_estimate=pl.CostEstimate(
            flops=flops, transcendentals=0, bytes_accessed=bytes_accessed
        ),
    )(x, w1, b1, w2, b2)

    return out if b_total == B else out[:B]


def init_params(key):
    """Deterministic init mimicking torch.nn.Linear default U(-1/sqrt(fan_in), +).

    Weights are created directly in (in, out) layout (already "pre-transposed"
    relative to torch's (out, in)) so the forward path has no per-call
    transpose or pad.
    """
    k1, k2, k3, k4 = jax.random.split(key, 4)
    bound1 = 1.0 / jnp.sqrt(IN_FEATURES)
    bound2 = 1.0 / jnp.sqrt(HIDDEN)
    w1 = jax.random.uniform(k1, (IN_FEATURES, HIDDEN), jnp.float32, -bound1, bound1)
    b1 = jax.random.uniform(k2, (1, HIDDEN), jnp.float32, -bound1, bound1)
    w2 = jax.random.uniform(k3, (HIDDEN, OUT_FEATURES), jnp.float32, -bound2, bound2)
    b2 = jax.random.uniform(k4, (1, OUT_FEATURES), jnp.float32, -bound2, bound2)
    return w1, b1, w2, b2


def reference_forward(x, w1, b1, w2, b2):
    h = jnp.maximum(x @ w1 + b1, 0.0)
    return h @ w2 + b2


if __name__ == "__main__":
    key = jax.random.PRNGKey(0)
    kx, kp = jax.random.split(key)
    B = 8
    x = jax.random.normal(kx, (B, IN_FEATURES), jnp.float32)
    w1, b1, w2, b2 = init_params(kp)

    out = model_gnome_forward(x, w1, b1, w2, b2)
    out = jax.block_until_ready(out)

    ref = reference_forward(x, w1, b1, w2, b2)
    assert out.shape == (B, OUT_FEATURES)
    assert jnp.allclose(out, ref, atol=1e-4, rtol=1e-4), "mismatch vs JAX reference"

    print("KERNEL_OK")
</pallas_src>

<mosaic_0001>
module attributes {stable_mosaic.version = 11 : i64} {
  func.func @_mlp_kernel(%arg0: i32, %arg1: memref<8x5547xf32, #tpu.memory_space<vmem>>, %arg2: memref<5547x25xf32, #tpu.memory_space<vmem>>, %arg3: memref<1x25xf32, #tpu.memory_space<vmem>>, %arg4: memref<25x5xf32, #tpu.memory_space<vmem>>, %arg5: memref<1x5xf32, #tpu.memory_space<vmem>>, %arg6: memref<8x5xf32, #tpu.memory_space<vmem>>) attributes {dimension_semantics = [#tpu.dimension_semantics<parallel>], iteration_bounds = array<i64: 1>, scalar_prefetch = 0 : i64, scratch_operands = 0 : i64, tpu.core_type = #tpu.core_type<tc>, window_params = [{transform_indices = @transform_0, window_bounds = array<i64: 8, 5547>}, {pipeline_mode = #tpu.pipeline_mode<synchronous>, transform_indices = @transform_1, window_bounds = array<i64: 5547, 25>}, {pipeline_mode = #tpu.pipeline_mode<synchronous>, transform_indices = @transform_2, window_bounds = array<i64: 1, 25>}, {pipeline_mode = #tpu.pipeline_mode<synchronous>, transform_indices = @transform_3, window_bounds = array<i64: 25, 5>}, {pipeline_mode = #tpu.pipeline_mode<synchronous>, transform_indices = @transform_4, window_bounds = array<i64: 1, 5>}, {transform_indices = @transform_5, window_bounds = array<i64: 8, 5>}]} {
    %c0 = arith.constant 0 : index
    %c0_0 = arith.constant 0 : index
    %0 = vector.load %arg1[%c0, %c0_0] : memref<8x5547xf32, #tpu.memory_space<vmem>>, vector<8x5547xf32>
    %c0_1 = arith.constant 0 : index
    %c0_2 = arith.constant 0 : index
    %1 = vector.load %arg2[%c0_1, %c0_2] : memref<5547x25xf32, #tpu.memory_space<vmem>>, vector<5547x25xf32>
    %cst = arith.constant dense<0.000000e+00> : vector<8x25xf32>
    %2 = tpu.matmul %0, %1, %cst {dimension_numbers = #tpu.dot_dimension_numbers<[1], [0], [0], [1], [0, 0, 1, 1], [], []>} : vector<8x5547xf32>, vector<5547x25xf32>, vector<8x25xf32> -> vector<8x25xf32>
    %c0_3 = arith.constant 0 : index
    %c0_4 = arith.constant 0 : index
    %3 = vector.load %arg3[%c0_3, %c0_4] : memref<1x25xf32, #tpu.memory_space<vmem>>, vector<1x25xf32>
    %4 = vector.broadcast %3 : vector<1x25xf32> to vector<8x25xf32>
    %5 = arith.addf %2, %4 : vector<8x25xf32>
    %cst_5 = arith.constant 0.000000e+00 : f32
    %6 = vector.broadcast %cst_5 : f32 to vector<8x25xf32>
    %7 = arith.maximumf %5, %6 : vector<8x25xf32>
    %c0_6 = arith.constant 0 : index
    %c0_7 = arith.constant 0 : index
    %8 = vector.load %arg4[%c0_6, %c0_7] : memref<25x5xf32, #tpu.memory_space<vmem>>, vector<25x5xf32>
    %cst_8 = arith.constant dense<0.000000e+00> : vector<8x5xf32>
    %9 = tpu.matmul %7, %8, %cst_8 {dimension_numbers = #tpu.dot_dimension_numbers<[1], [0], [0], [1], [0, 0, 1, 1], [], []>} : vector<8x25xf32>, vector<25x5xf32>, vector<8x5xf32> -> vector<8x5xf32>
    %c0_9 = arith.constant 0 : index
    %c0_10 = arith.constant 0 : index
    %10 = vector.load %arg5[%c0_9, %c0_10] : memref<1x5xf32, #tpu.memory_space<vmem>>, vector<1x5xf32>
    %11 = vector.broadcast %10 : vector<1x5xf32> to vector<8x5xf32>
    %12 = arith.addf %9, %11 : vector<8x5xf32>
    %c0_11 = arith.constant 0 : index
    %c0_12 = arith.constant 0 : index
    %13 = vector.load %arg6[%c0_11, %c0_12] : memref<8x5xf32, #tpu.memory_space<vmem>>, vector<8x5xf32>
    tpu.vector_store %arg6[%c0_11, %c0_12], %12 {strides = array<i32>} : memref<8x5xf32, #tpu.memory_space<vmem>>, vector<8x5xf32>,
    return
  }
  func.func @transform_0(%arg0: i32) -> (i32, i32) {
    %c0_i32 = arith.constant 0 : i32
    %c0_i32_0 = arith.constant 0 : i32
    return %arg0, %c0_i32 : i32, i32
  }
  func.func @transform_1(%arg0: i32) -> (i32, i32) {
    %c0_i32 = arith.constant 0 : i32
    %c0_i32_0 = arith.constant 0 : i32
    %c0_i32_1 = arith.constant 0 : i32
    return %c0_i32, %c0_i32_0 : i32, i32
  }
  func.func @transform_2(%arg0: i32) -> (i32, i32) {
    %c0_i32 = arith.constant 0 : i32
    %c0_i32_0 = arith.constant 0 : i32
    %c0_i32_1 = arith.constant 0 : i32
    return %c0_i32, %c0_i32_0 : i32, i32
  }
  func.func @transform_3(%arg0: i32) -> (i32, i32) {
    %c0_i32 = arith.constant 0 : i32
    %c0_i32_0 = arith.constant 0 : i32
    %c0_i32_1 = arith.constant 0 : i32
    return %c0_i32, %c0_i32_0 : i32, i32
  }
  func.func @transform_4(%arg0: i32) -> (i32, i32) {
    %c0_i32 = arith.constant 0 : i32
    %c0_i32_0 = arith.constant 0 : i32
    %c0_i32_1 = arith.constant 0 : i32
    return %c0_i32, %c0_i32_0 : i32, i32
  }
  func.func @transform_5(%arg0: i32) -> (i32, i32) {
    %c0_i32 = arith.constant 0 : i32
    %c0_i32_0 = arith.constant 0 : i32
    return %arg0, %c0_i32 : i32, i32
  }
}

</mosaic_0001>

<llo_original>
// kernel: model_gnome_forward.1
$region0: #{model_gnome_forward.1}
  #allocation0 [shape = 'u32[]', space=smem, size = 0x4, offset = 0x4, fixed_abs, tag = 'smem constant byte address 0x4 - core index']
  #allocation1 [shape = 'u32[144,128]{1,0:T(1,128)}', space=vmem, size = 0x12000, scoped, tag = 'internal scratch']
  %s0 = inlined_call_operand.vmem [shape: f32[8,5547], index: 0, kind: input, shape index: {}]
  %s1 = inlined_call_operand.vmem [shape: f32[5547,25], index: 1, kind: input, shape index: {}]
  %s2 = inlined_call_operand.vmem [shape: f32[1,25], index: 2, kind: input, shape index: {}]
  %s3 = inlined_call_operand.vmem [shape: f32[25,5], index: 3, kind: input, shape index: {}]
  %s4 = inlined_call_operand.vmem [shape: f32[1,5], index: 4, kind: input, shape index: {}]
  %s5 = inlined_call_operand.hbm [shape: f32[8,5], index: 5, kind: output, shape index: {}]
  %s6 = sld [smem:[#allocation0]]
  $region30: #{model_gnome_forward.1} parent=0
    _
  %s8 = ssub.s32 1, %s6
  %s9 = scalar_select 0, %s8, %s6
  $region1: #{model_gnome_forward.1} parent=0
    #allocation2 [shape = 'u8[4096]{0}', space=vmem, size = 0x1000, scoped, tag = 'output window, operand 0, single buffered']
    #allocation3 [shape = 's32[1]{0}', space=sflag, size = 0x4, scoped, tag = 'scoped memory for model_gnome_forward.1']
    %10 = vsyncpa [#allocation3], 0
    // Predicated region
    $region2: #{model_gnome_forward.1} parent=1 // pred_check
      _
    $region3: #{model_gnome_forward.1} parent=1 // pred_check_branch
      %12 = sbr.rel (0) target = $region5
    $region4: #{model_gnome_forward.1} parent=1 // pred_region
      _
    $region5: #{model_gnome_forward.1} parent=1 // pred_fallthru
      _
    // Predicated region
    $region6: #{model_gnome_forward.1} parent=1 // pred_check
      _
    $region7: #{model_gnome_forward.1} parent=1 // pred_check_branch
      %14 = sbr.rel (0) target = $region9
    $region8: #{model_gnome_forward.1} parent=1 // pred_region
      _
    $region9: #{model_gnome_forward.1} parent=1 // pred_fallthru
      _
    // Predicated region
    $region10: #{model_gnome_forward.1} parent=1 // pred_check
      _
    $region11: #{model_gnome_forward.1} parent=1 // pred_check_branch
      %16 = sbr.rel (0) target = $region13
    $region12: #{model_gnome_forward.1} parent=1 // pred_region
      _
    $region13: #{model_gnome_forward.1} parent=1 // pred_fallthru
      _
    // Predicated region
    $region14: #{model_gnome_forward.1} parent=1 // pred_check
      _
    $region15: #{model_gnome_forward.1} parent=1 // pred_check_branch
      %18 = sbr.rel (0) target = $region17
    $region16: #{model_gnome_forward.1} parent=1 // pred_region
      _
    $region17: #{model_gnome_forward.1} parent=1 // pred_fallthru
      _
    // Predicated region
    $region18: #{model_gnome_forward.1} parent=1 // pred_check
      _
    $region19: #{model_gnome_forward.1} parent=1 // pred_check_branch
      %20 = sbr.rel (0) target = $region21
    $region20: #{model_gnome_forward.1} parent=1 // pred_region
      _
    $region21: #{model_gnome_forward.1} parent=1 // pred_fallthru
      _
    %v21 = vld [vmem:[%s0] sm:$0xff]
    %v22 = vld [vmem:[%s0 + $0x8] sm:$0xff]
    %v23 = vld [vmem:[%s0 + $0x10] sm:$0xff]
    %v24 = vld [vmem:[%s0 + $0x18] sm:$0xff]
    %v25 = vld [vmem:[%s0 + $0x20] sm:$0xff]
    %v26 = vld [vmem:[%s0 + $0x28] sm:$0xff]
    %v27 = vld [vmem:[%s0 + $0x30] sm:$0xff]
    %v28 = vld [vmem:[%s0 + $0x38] sm:$0xff]
    %v29 = vld [vmem:[%s0 + $0x40] sm:$0xff]
    %v30 = vld [vmem:[%s0 + $0x48] sm:$0xff]
    %v31 = vld [vmem:[%s0 + $0x50] sm:$0xff]
    %v32 = vld [vmem:[%s0 + $0x58] sm:$0xff]
    %v33 = vld [vmem:[%s0 + $0x60] sm:$0xff]
    %v34 = vld [vmem:[%s0 + $0x68] sm:$0xff]
    %v35 = vld [vmem:[%s0 + $0x70] sm:$0xff]
    %v36 = vld [vmem:[%s0 + $0x78] sm:$0xff]
    %v37 = vld [vmem:[%s0 + $0x80] sm:$0xff]
    %v38 = vld [vmem:[%s0 + $0x88] sm:$0xff]
    %v39 = vld [vmem:[%s0 + $0x90] sm:$0xff]
    %v40 = vld [vmem:[%s0 + $0x98] sm:$0xff]
    %v41 = vld [vmem:[%s0 + $0xa0] sm:$0xff]
    %v42 = vld [vmem:[%s0 + $0xa8] sm:$0xff]
    %v43 = vld [vmem:[%s0 + $0xb0] sm:$0xff]
    %v44 = vld [vmem:[%s0 + $0xb8] sm:$0xff]
    %v45 = vld [vmem:[%s0 + $0xc0] sm:$0xff]
    %v46 = vld [vmem:[%s0 + $0xc8] sm:$0xff]
    %v47 = vld [vmem:[%s0 + $0xd0] sm:$0xff]
    %v48 = vld [vmem:[%s0 + $0xd8] sm:$0xff]
    %v49 = vld [vmem:[%s0 + $0xe0] sm:$0xff]
    %v50 = vld [vmem:[%s0 + $0xe8] sm:$0xff]
    %v51 = vld [vmem:[%s0 + $0xf0] sm:$0xff]
    %v52 = vld [vmem:[%s0 + $0xf8] sm:$0xff]
    %v53 = vld [vmem:[%s0 + $0x100] sm:$0xff]
    %v54 = vld [vmem:[%s0 + $0x108] sm:$0xff]
    %v55 = vld [vmem:[%s0 + $0x110] sm:$0xff]
    %v56 = vld [vmem:[%s0 + $0x118] sm:$0xff]
    %v57 = vld [vmem:[%s0 + $0x120] sm:$0xff]
    %v58 = vld [vmem:[%s0 + $0x128] sm:$0xff]
    %v59 = vld [vmem:[%s0 + $0x130] sm:$0xff]
    %v60 = vld [vmem:[%s0 + $0x138] sm:$0xff]
    %v61 = vld [vmem:[%s0 + $0x140] sm:$0xff]
    %v62 = vld [vmem:[%s0 + $0x148] sm:$0xff]
    %v63 = vld [vmem:[%s0 + $0x150] sm:$0xff]
    %v64 = vld [vmem:[%s0 + $0x158] sm:$0xff]
    %v65 = vld [vmem:[%s1] sm:$0xff]
    %v66 = vld [vmem:[%s1 + $0x8] sm:$0xff]
    %v67 = vld [vmem:[%s1 + $0x10] sm:$0xff]
    %v68 = vld [vmem:[%s1 + $0x18] sm:$0xff]
    %v69 = vld [vmem:[%s1 + $0x20] sm:$0xff]
    %v70 = vld [vmem:[%s1 + $0x28] sm:$0xff]
    %v71 = vld [vmem:[%s1 + $0x30] sm:$0xff]
    %v72 = vld [vmem:[%s1 + $0x38] sm:$0xff]
    %v73 = vld [vmem:[%s1 + $0x40] sm:$0xff]
    %v74 = vld [vmem:[%s1 + $0x48] sm:$0xff]
    %v75 = vld [vmem:[%s1 + $0x50] sm:$0xff]
    %v76 = vld [vmem:[%s1 + $0x58] sm:$0xff]
    %v77 = vld [vmem:[%s1 + $0x60] sm:$0xff]
    %v78 = vld [vmem:[%s1 + $0x68] sm:$0xff]
    %v79 = vld [vmem:[%s1 + $0x70] sm:$0xff]
    %v80 = vld [vmem:[%s1 + $0x78] sm:$0xff]
    %v81 = vld [vmem:[%s1 + $0x80] sm:$0xff]
    %v82 = vld [vmem:[%s1 + $0x88] sm:$0xff]
    %v83 = vld [vmem:[%s1 + $0x90] sm:$0xff]
    %v84 = vld [vmem:[%s1 + $0x98] sm:$0xff]
    %v85 = vld [vmem:[%s1 + $0xa0] sm:$0xff]
    %v86 = vld [vmem:[%s1 + $0xa8] sm:$0xff]
    %v87 = vld [vmem:[%s1 + $0xb0] sm:$0xff]
    %v88 = vld [vmem:[%s1 + $0xb8] sm:$0xff]
    %v89 = vld [vmem:[%s1 + $0xc0] sm:$0xff]
    %v90 = vld [vmem:[%s1 + $0xc8] sm:$0xff]
    %v91 = vld [vmem:[%s1 + $0xd0] sm:$0xff]
    %v92 = vld [vmem:[%s1 + $0xd8] sm:$0xff]
    %v93 = vld [vmem:[%s1 + $0xe0] sm:$0xff]
    %v94 = vld [vmem:[%s1 + $0xe8] sm:$0xff]
    %v95 = vld [vmem:[%s1 + $0xf0] sm:$0xff]
    %v96 = vld [vmem:[%s1 + $0xf8] sm:$0xff]
    %v97 = vld [vmem:[%s1 + $0x100] sm:$0xff]
    %v98 = vld [vmem:[%s1 + $0x108] sm:$0xff]
    %v99 = vld [vmem:[%s1 + $0x110] sm:$0xff]
    %v100 = vld [vmem:[%s1 + $0x118] sm:$0xff]
    %v101 = vld [vmem:[%s1 + $0x120] sm:$0xff]
    %v102 = vld [vmem:[%s1 + $0x128] sm:$0xff]
    %v103 = vld [vmem:[%s1 + $0x130] sm:$0xff]
    %v104 = vld [vmem:[%s1 + $0x138] sm:$0xff]
    %v105 = vld [vmem:[%s1 + $0x140] sm:$0xff]
    %v106 = vld [vmem:[%s1 + $0x148] sm:$0xff]
    %v107 = vld [vmem:[%s1 + $0x150] sm:$0xff]
    %v108 = vld [vmem:[%s1 + $0x158] sm:$0xff]
    %v109 = vld [vmem:[%s1 + $0x160] sm:$0xff]
    %v110 = vld [vmem:[%s1 + $0x168] sm:$0xff]
    %v111 = vld [vmem:[%s1 + $0x170] sm:$0xff]
    %v112 = vld [vmem:[%s1 + $0x178] sm:$0xff]
    %v113 = vld [vmem:[%s1 + $0x180] sm:$0xff]
    %v114 = vld [vmem:[%s1 + $0x188] sm:$0xff]
    %v115 = vld [vmem:[%s1 + $0x190] sm:$0xff]
    %v116 = vld [vmem:[%s1 + $0x198] sm:$0xff]
    %v117 = vld [vmem:[%s1 + $0x1a0] sm:$0xff]
    %v118 = vld [vmem:[%s1 + $0x1a8] sm:$0xff]
    %v119 = vld [vmem:[%s1 + $0x1b0] sm:$0xff]
    %v120 = vld [vmem:[%s1 + $0x1b8] sm:$0xff]
    %v121 = vld [vmem:[%s1 + $0x1c0] sm:$0xff]
    %v122 = vld [vmem:[%s1 + $0x1c8] sm:$0xff]
    %v123 = vld [vmem:[%s1 + $0x1d0] sm:$0xff]
    %v124 = vld [vmem:[%s1 + $0x1d8] sm:$0xff]
    %v125 = vld [vmem:[%s1 + $0x1e0] sm:$0xff]
    %v126 = vld [vmem:[%s1 + $0x1e8] sm:$0xff]
    %v127 = vld [vmem:[%s1 + $0x1f0] sm:$0xff]
    %v128 = vld [vmem:[%s1 + $0x1f8] sm:$0xff]
    %v129 = vld [vmem:[%s1 + $0x200] sm:$0xff]
    %v130 = vld [vmem:[%s1 + $0x208] sm:$0xff]
    %v131 = vld [vmem:[%s1 + $0x210] sm:$0xff]
    %v132 = vld [vmem:[%s1 + $0x218] sm:$0xff]
    %v133 = vld [vmem:[%s1 + $0x220] sm:$0xff]
    %v134 = vld [vmem:[%s1 + $0x228] sm:$0xff]
    %v135 = vld [vmem:[%s1 + $0x230] sm:$0xff]
    %v136 = vld [vmem:[%s1 + $0x238] sm:$0xff]
    %v137 = vld [vmem:[%s1 + $0x240] sm:$0xff]
    %v138 = vld [vmem:[%s1 + $0x248] sm:$0xff]
    %v139 = vld [vmem:[%s1 + $0x250] sm:$0xff]
    %v140 = vld [vmem:[%s1 + $0x258] sm:$0xff]
    %v141 = vld [vmem:[%s1 + $0x260] sm:$0xff]
    %v142 = vld [vmem:[%s1 + $0x268] sm:$0xff]
    %v143 = vld [vmem:[%s1 + $0x270] sm:$0xff]
    %v144 = vld [vmem:[%s1 + $0x278] sm:$0xff]
    %v145 = vld [vmem:[%s1 + $0x280] sm:$0xff]
    %v146 = vld [vmem:[%s1 + $0x288] sm:$0xff]
    %v147 = vld [vmem:[%s1 + $0x290] sm:$0xff]
    %v148 = vld [vmem:[%s1 + $0x298] sm:$0xff]
    %v149 = vld [vmem:[%s1 + $0x2a0] sm:$0xff]
    %v150 = vld [vmem:[%s1 + $0x2a8] sm:$0xff]
    %v151 = vld [vmem:[%s1 + $0x2b0] sm:$0xff]
    %v152 = vld [vmem:[%s1 + $0x2b8] sm:$0xff]
    %v153 = vld [vmem:[%s1 + $0x2c0] sm:$0xff]
    %v154 = vld [vmem:[%s1 + $0x2c8] sm:$0xff]
    %v155 = vld [vmem:[%s1 + $0x2d0] sm:$0xff]
    %v156 = vld [vmem:[%s1 + $0x2d8] sm:$0xff]
    %v157 = vld [vmem:[%s1 + $0x2e0] sm:$0xff]
    %v158 = vld [vmem:[%s1 + $0x2e8] sm:$0xff]
    %v159 = vld [vmem:[%s1 + $0x2f0] sm:$0xff]
    %v160 = vld [vmem:[%s1 + $0x2f8] sm:$0xff]
    %v161 = vld [vmem:[%s1 + $0x300] sm:$0xff]
    %v162 = vld [vmem:[%s1 + $0x308] sm:$0xff]
    %v163 = vld [vmem:[%s1 + $0x310] sm:$0xff]
    %v164 = vld [vmem:[%s1 + $0x318] sm:$0xff]
    %v165 = vld [vmem:[%s1 + $0x320] sm:$0xff]
    %v166 = vld [vmem:[%s1 + $0x328] sm:$0xff]
    %v167 = vld [vmem:[%s1 + $0x330] sm:$0xff]
    %v168 = vld [vmem:[%s1 + $0x338] sm:$0xff]
    %v169 = vld [vmem:[%s1 + $0x340] sm:$0xff]
    %v170 = vld [vmem:[%s1 + $0x348] sm:$0xff]
    %v171 = vld [vmem:[%s1 + $0x350] sm:$0xff]
    %v172 = vld [vmem:[%s1 + $0x358] sm:$0xff]
    %v173 = vld [vmem:[%s1 + $0x360] sm:$0xff]
    %v174 = vld [vmem:[%s1 + $0x368] sm:$0xff]
    %v175 = vld [vmem:[%s1 + $0x370] sm:$0xff]
    %v176 = vld [vmem:[%s1 + $0x378] sm:$0xff]
    %v177 = vld [vmem:[%s1 + $0x380] sm:$0xff]
    %v178 = vld [vmem:[%s1 + $0x388] sm:$0xff]
    %v179 = vld [vmem:[%s1 + $0x390] sm:$0xff]
    %v180 = vld [vmem:[%s1 + $0x398] sm:$0xff]
    %v181 = vld [vmem:[%s1 + $0x3a0] sm:$0xff]
    %v182 = vld [vmem:[%s1 + $0x3a8] sm:$0xff]
    %v183 = vld [vmem:[%s1 + $0x3b0] sm:$0xff]
    %v184 = vld [vmem:[%s1 + $0x3b8] sm:$0xff]
    %v185 = vld [vmem:[%s1 + $0x3c0] sm:$0xff]
    %v186 = vld [vmem:[%s1 + $0x3c8] sm:$0xff]
    %v187 = vld [vmem:[%s1 + $0x3d0] sm:$0xff]
    %v188 = vld [vmem:[%s1 + $0x3d8] sm:$0xff]
    %v189 = vld [vmem:[%s1 + $0x3e0] sm:$0xff]
    %v190 = vld [vmem:[%s1 + $0x3e8] sm:$0xff]
    %v191 = vld [vmem:[%s1 + $0x3f0] sm:$0xff]
    %v192 = vld [vmem:[%s1 + $0x3f8] sm:$0xff]
    %v193 = vld [vmem:[%s1 + $0x400] sm:$0xff]
    %v194 = vld [vmem:[%s1 + $0x408] sm:$0xff]
    %v195 = vld [vmem:[%s1 + $0x410] sm:$0xff]
    %v196 = vld [vmem:[%s1 + $0x418] sm:$0xff]
    %v197 = vld [vmem:[%s1 + $0x420] sm:$0xff]
    %v198 = vld [vmem:[%s1 + $0x428] sm:$0xff]
    %v199 = vld [vmem:[%s1 + $0x430] sm:$0xff]
    %v200 = vld [vmem:[%s1 + $0x438] sm:$0xff]
    %v201 = vld [vmem:[%s1 + $0x440] sm:$0xff]
    %v202 = vld [vmem:[%s1 + $0x448] sm:$0xff]
    %v203 = vld [vmem:[%s1 + $0x450] sm:$0xff]
    %v204 = vld [vmem:[%s1 + $0x458] sm:$0xff]
    %v205 = vld [vmem:[%s1 + $0x460] sm:$0xff]
    %v206 = vld [vmem:[%s1 + $0x468] sm:$0xff]
    %v207 = vld [vmem:[%s1 + $0x470] sm:$0xff]
    %v208 = vld [vmem:[%s1 + $0x478] sm:$0xff]
    %v209 = vld [vmem:[%s1 + $0x480] sm:$0xff]
    %v210 = vld [vmem:[%s1 + $0x488] sm:$0xff]
    %v211 = vld [vmem:[%s1 + $0x490] sm:$0xff]
    %v212 = vld [vmem:[%s1 + $0x498] sm:$0xff]
    %v213 = vld [vmem:[%s1 + $0x4a0] sm:$0xff]
    %v214 = vld [vmem:[%s1 + $0x4a8] sm:$0xff]
    %v215 = vld [vmem:[%s1 + $0x4b0] sm:$0xff]
    %v216 = vld [vmem:[%s1 + $0x4b8] sm:$0xff]
    %v217 = vld [vmem:[%s1 + $0x4c0] sm:$0xff]
    %v218 = vld [vmem:[%s1 + $0x4c8] sm:$0xff]
    %v219 = vld [vmem:[%s1 + $0x4d0] sm:$0xff]
    %v220 = vld [vmem:[%s1 + $0x4d8] sm:$0xff]
    %v221 = vld [vmem:[%s1 + $0x4e0] sm:$0xff]
    %v222 = vld [vmem:[%s1 + $0x4e8] sm:$0xff]
    %v223 = vld [vmem:[%s1 + $0x4f0] sm:$0xff]
    %v224 = vld [vmem:[%s1 + $0x4f8] sm:$0xff]
    %v225 = vld [vmem:[%s1 + $0x500] sm:$0xff]
    %v226 = vld [vmem:[%s1 + $0x508] sm:$0xff]
    %v227 = vld [vmem:[%s1 + $0x510] sm:$0xff]
    %v228 = vld [vmem:[%s1 + $0x518] sm:$0xff]
    %v229 = vld [vmem:[%s1 + $0x520] sm:$0xff]
    %v230 = vld [vmem:[%s1 + $0x528] sm:$0xff]
    %v231 = vld [vmem:[%s1 + $0x530] sm:$0xff]
    %v232 = vld [vmem:[%s1 + $0x538] sm:$0xff]
    %v233 = vld [vmem:[%s1 + $0x540] sm:$0xff]
    %v234 = vld [vmem:[%s1 + $0x548] sm:$0xff]
    %v235 = vld [vmem:[%s1 + $0x550] sm:$0xff]
    %v236 = vld [vmem:[%s1 + $0x558] sm:$0xff]
    %v237 = vld [vmem:[%s1 + $0x560] sm:$0xff]
    %v238 = vld [vmem:[%s1 + $0x568] sm:$0xff]
    %v239 = vld [vmem:[%s1 + $0x570] sm:$0xff]
    %v240 = vld [vmem:[%s1 + $0x578] sm:$0xff]
    %v241 = vld [vmem:[%s1 + $0x580] sm:$0xff]
    %v242 = vld [vmem:[%s1 + $0x588] sm:$0xff]
    %v243 = vld [vmem:[%s1 + $0x590] sm:$0xff]
    %v244 = vld [vmem:[%s1 + $0x598] sm:$0xff]
    %v245 = vld [vmem:[%s1 + $0x5a0] sm:$0xff]
    %v246 = vld [vmem:[%s1 + $0x5a8] sm:$0xff]
    %v247 = vld [vmem:[%s1 + $0x5b0] sm:$0xff]
    %v248 = vld [vmem:[%s1 + $0x5b8] sm:$0xff]
    %v249 = vld [vmem:[%s1 + $0x5c0] sm:$0xff]
    %v250 = vld [vmem:[%s1 + $0x5c8] sm:$0xff]
    %v251 = vld [vmem:[%s1 + $0x5d0] sm:$0xff]
    %v252 = vld [vmem:[%s1 + $0x5d8] sm:$0xff]
    %v253 = vld [vmem:[%s1 + $0x5e0] sm:$0xff]
    %v254 = vld [vmem:[%s1 + $0x5e8] sm:$0xff]
    %v255 = vld [vmem:[%s1 + $0x5f0] sm:$0xff]
    %v256 = vld [vmem:[%s1 + $0x5f8] sm:$0xff]
    %v257 = vld [vmem:[%s1 + $0x600] sm:$0xff]
    %v258 = vld [vmem:[%s1 + $0x608] sm:$0xff]
    %v259 = vld [vmem:[%s1 + $0x610] sm:$0xff]
    %v260 = vld [vmem:[%s1 + $0x618] sm:$0xff]
    %v261 = vld [vmem:[%s1 + $0x620] sm:$0xff]
    %v262 = vld [vmem:[%s1 + $0x628] sm:$0xff]
    %v263 = vld [vmem:[%s1 + $0x630] sm:$0xff]
    %v264 = vld [vmem:[%s1 + $0x638] sm:$0xff]
    %v265 = vld [vmem:[%s1 + $0x640] sm:$0xff]
    %v266 = vld [vmem:[%s1 + $0x648] sm:$0xff]
    %v267 = vld [vmem:[%s1 + $0x650] sm:$0xff]
    %v268 = vld [vmem:[%s1 + $0x658] sm:$0xff]
    %v269 = vld [vmem:[%s1 + $0x660] sm:$0xff]
    %v270 = vld [vmem:[%s1 + $0x668] sm:$0xff]
    %v271 = vld [vmem:[%s1 + $0x670] sm:$0xff]
    %v272 = vld [vmem:[%s1 + $0x678] sm:$0xff]
    %v273 = vld [vmem:[%s1 + $0x680] sm:$0xff]
    %v274 = vld [vmem:[%s1 + $0x688] sm:$0xff]
    %v275 = vld [vmem:[%s1 + $0x690] sm:$0xff]
    %v276 = vld [vmem:[%s1 + $0x698] sm:$0xff]
    %v277 = vld [vmem:[%s1 + $0x6a0] sm:$0xff]
    %v278 = vld [vmem:[%s1 + $0x6a8] sm:$0xff]
    %v279 = vld [vmem:[%s1 + $0x6b0] sm:$0xff]
    %v280 = vld [vmem:[%s1 + $0x6b8] sm:$0xff]
    %v281 = vld [vmem:[%s1 + $0x6c0] sm:$0xff]
    %v282 = vld [vmem:[%s1 + $0x6c8] sm:$0xff]
    %v283 = vld [vmem:[%s1 + $0x6d0] sm:$0xff]
    %v284 = vld [vmem:[%s1 + $0x6d8] sm:$0xff]
    %v285 = vld [vmem:[%s1 + $0x6e0] sm:$0xff]
    %v286 = vld [vmem:[%s1 + $0x6e8] sm:$0xff]
    %v287 = vld [vmem:[%s1 + $0x6f0] sm:$0xff]
    %v288 = vld [vmem:[%s1 + $0x6f8] sm:$0xff]
    %v289 = vld [vmem:[%s1 + $0x700] sm:$0xff]
    %v290 = vld [vmem:[%s1 + $0x708] sm:$0xff]
    %v291 = vld [vmem:[%s1 + $0x710] sm:$0xff]
    %v292 = vld [vmem:[%s1 + $0x718] sm:$0xff]
    %v293 = vld [vmem:[%s1 + $0x720] sm:$0xff]
    %v294 = vld [vmem:[%s1 + $0x728] sm:$0xff]
    %v295 = vld [vmem:[%s1 + $0x730] sm:$0xff]
    %v296 = vld [vmem:[%s1 + $0x738] sm:$0xff]
    %v297 = vld [vmem:[%s1 + $0x740] sm:$0xff]
    %v298 = vld [vmem:[%s1 + $0x748] sm:$0xff]
    %v299 = vld [vmem:[%s1 + $0x750] sm:$0xff]
    %v300 = vld [vmem:[%s1 + $0x758] sm:$0xff]
    %v301 = vld [vmem:[%s1 + $0x760] sm:$0xff]
    %v302 = vld [vmem:[%s1 + $0x768] sm:$0xff]
    %v303 = vld [vmem:[%s1 + $0x770] sm:$0xff]
    %v304 = vld [vmem:[%s1 + $0x778] sm:$0xff]
    %v305 = vld [vmem:[%s1 + $0x780] sm:$0xff]
    %v306 = vld [vmem:[%s1 + $0x788] sm:$0xff]
    %v307 = vld [vmem:[%s1 + $0x790] sm:$0xff]
    %v308 = vld [vmem:[%s1 + $0x798] sm:$0xff]
    %v309 = vld [vmem:[%s1 + $0x7a0] sm:$0xff]
    %v310 = vld [vmem:[%s1 + $0x7a8] sm:$0xff]
    %v311 = vld [vmem:[%s1 + $0x7b0] sm:$0xff]
    %v312 = vld [vmem:[%s1 + $0x7b8] sm:$0xff]
    %v313 = vld [vmem:[%s1 + $0x7c0] sm:$0xff]
    %v314 = vld [vmem:[%s1 + $0x7c8] sm:$0xff]
    %v315 = vld [vmem:[%s1 + $0x7d0] sm:$0xff]
    %v316 = vld [vmem:[%s1 + $0x7d8] sm:$0xff]
    %v317 = vld [vmem:[%s1 + $0x7e0] sm:$0xff]
    %v318 = vld [vmem:[%s1 + $0x7e8] sm:$0xff]
    %v319 = vld [vmem:[%s1 + $0x7f0] sm:$0xff]
    %v320 = vld [vmem:[%s1 + $0x7f8] sm:$0xff]
    %v321 = vld [vmem:[%s1 + $0x800] sm:$0xff]
    %v322 = vld [vmem:[%s1 + $0x808] sm:$0xff]
    %v323 = vld [vmem:[%s1 + $0x810] sm:$0xff]
    %v324 = vld [vmem:[%s1 + $0x818] sm:$0xff]
    %v325 = vld [vmem:[%s1 + $0x820] sm:$0xff]
    %v326 = vld [vmem:[%s1 + $0x828] sm:$0xff]
    %v327 = vld [vmem:[%s1 + $0x830] sm:$0xff]
    %v328 = vld [vmem:[%s1 + $0x838] sm:$0xff]
    %v329 = vld [vmem:[%s1 + $0x840] sm:$0xff]
    %v330 = vld [vmem:[%s1 + $0x848] sm:$0xff]
    %v331 = vld [vmem:[%s1 + $0x850] sm:$0xff]
    %v332 = vld [vmem:[%s1 + $0x858] sm:$0xff]
    %v333 = vld [vmem:[%s1 + $0x860] sm:$0xff]
    %v334 = vld [vmem:[%s1 + $0x868] sm:$0xff]
    %v335 = vld [vmem:[%s1 + $0x870] sm:$0xff]
    %v336 = vld [vmem:[%s1 + $0x878] sm:$0xff]
    %v337 = vld [vmem:[%s1 + $0x880] sm:$0xff]
    %v338 = vld [vmem:[%s1 + $0x888] sm:$0xff]
    %v339 = vld [vmem:[%s1 + $0x890] sm:$0xff]
    %v340 = vld [vmem:[%s1 + $0x898] sm:$0xff]
    %v341 = vld [vmem:[%s1 + $0x8a0] sm:$0xff]
    %v342 = vld [vmem:[%s1 + $0x8a8] sm:$0xff]
    %v343 = vld [vmem:[%s1 + $0x8b0] sm:$0xff]
    %v344 = vld [vmem:[%s1 + $0x8b8] sm:$0xff]
    %v345 = vld [vmem:[%s1 + $0x8c0] sm:$0xff]
    %v346 = vld [vmem:[%s1 + $0x8c8] sm:$0xff]
    %v347 = vld [vmem:[%s1 + $0x8d0] sm:$0xff]
    %v348 = vld [vmem:[%s1 + $0x8d8] sm:$0xff]
    %v349 = vld [vmem:[%s1 + $0x8e0] sm:$0xff]
    %v350 = vld [vmem:[%s1 + $0x8e8] sm:$0xff]
    %v351 = vld [vmem:[%s1 + $0x8f0] sm:$0xff]
    %v352 = vld [vmem:[%s1 + $0x8f8] sm:$0xff]
    %v353 = vld [vmem:[%s1 + $0x900] sm:$0xff]
    %v354 = vld [vmem:[%s1 + $0x908] sm:$0xff]
    %v355 = vld [vmem:[%s1 + $0x910] sm:$0xff]
    %v356 = vld [vmem:[%s1 + $0x918] sm:$0xff]
    %v357 = vld [vmem:[%s1 + $0x920] sm:$0xff]
    %v358 = vld [vmem:[%s1 + $0x928] sm:$0xff]
    %v359 = vld [vmem:[%s1 + $0x930] sm:$0xff]
    %v360 = vld [vmem:[%s1 + $0x938] sm:$0xff]
    %v361 = vld [vmem:[%s1 + $0x940] sm:$0xff]
    %v362 = vld [vmem:[%s1 + $0x948] sm:$0xff]
    %v363 = vld [vmem:[%s1 + $0x950] sm:$0xff]
    %v364 = vld [vmem:[%s1 + $0x958] sm:$0xff]
    %v365 = vld [vmem:[%s1 + $0x960] sm:$0xff]
    %v366 = vld [vmem:[%s1 + $0x968] sm:$0xff]
    %v367 = vld [vmem:[%s1 + $0x970] sm:$0xff]
    %v368 = vld [vmem:[%s1 + $0x978] sm:$0xff]
    %v369 = vld [vmem:[%s1 + $0x980] sm:$0xff]
    %v370 = vld [vmem:[%s1 + $0x988] sm:$0xff]
    %v371 = vld [vmem:[%s1 + $0x990] sm:$0xff]
    %v372 = vld [vmem:[%s1 + $0x998] sm:$0xff]
    %v373 = vld [vmem:[%s1 + $0x9a0] sm:$0xff]
    %v374 = vld [vmem:[%s1 + $0x9a8] sm:$0xff]
    %v375 = vld [vmem:[%s1 + $0x9b0] sm:$0xff]
    %v376 = vld [vmem:[%s1 + $0x9b8] sm:$0xff]
    %v377 = vld [vmem:[%s1 + $0x9c0] sm:$0xff]
    %v378 = vld [vmem:[%s1 + $0x9c8] sm:$0xff]
    %v379 = vld [vmem:[%s1 + $0x9d0] sm:$0xff]
    %v380 = vld [vmem:[%s1 + $0x9d8] sm:$0xff]
    %v381 = vld [vmem:[%s1 + $0x9e0] sm:$0xff]
    %v382 = vld [vmem:[%s1 + $0x9e8] sm:$0xff]
    %v383 = vld [vmem:[%s1 + $0x9f0] sm:$0xff]
    %v384 = vld [vmem:[%s1 + $0x9f8] sm:$0xff]
    %v385 = vld [vmem:[%s1 + $0xa00] sm:$0xff]
    %v386 = vld [vmem:[%s1 + $0xa08] sm:$0xff]
    %v387 = vld [vmem:[%s1 + $0xa10] sm:$0xff]
    %v388 = vld [vmem:[%s1 + $0xa18] sm:$0xff]
    %v389 = vld [vmem:[%s1 + $0xa20] sm:$0xff]
    %v390 = vld [vmem:[%s1 + $0xa28] sm:$0xff]
    %v391 = vld [vmem:[%s1 + $0xa30] sm:$0xff]
    %v392 = vld [vmem:[%s1 + $0xa38] sm:$0xff]
    %v393 = vld [vmem:[%s1 + $0xa40] sm:$0xff]
    %v394 = vld [vmem:[%s1 + $0xa48] sm:$0xff]
    %v395 = vld [vmem:[%s1 + $0xa50] sm:$0xff]
    %v396 = vld [vmem:[%s1 + $0xa58] sm:$0xff]
    %v397 = vld [vmem:[%s1 + $0xa60] sm:$0xff]
    %v398 = vld [vmem:[%s1 + $0xa68] sm:$0xff]
    %v399 = vld [vmem:[%s1 + $0xa70] sm:$0xff]
    %v400 = vld [vmem:[%s1 + $0xa78] sm:$0xff]
    %v401 = vld [vmem:[%s1 + $0xa80] sm:$0xff]
    %v402 = vld [vmem:[%s1 + $0xa88] sm:$0xff]
    %v403 = vld [vmem:[%s1 + $0xa90] sm:$0xff]
    %v404 = vld [vmem:[%s1 + $0xa98] sm:$0xff]
    %v405 = vld [vmem:[%s1 + $0xaa0] sm:$0xff]
    %v406 = vld [vmem:[%s1 + $0xaa8] sm:$0xff]
    %v407 = vld [vmem:[%s1 + $0xab0] sm:$0xff]
    %v408 = vld [vmem:[%s1 + $0xab8] sm:$0xff]
    %v409 = vld [vmem:[%s1 + $0xac0] sm:$0xff]
    %v410 = vld [vmem:[%s1 + $0xac8] sm:$0xff]
    %v411 = vld [vmem:[%s1 + $0xad0] sm:$0xff]
    %v412 = vld [vmem:[%s1 + $0xad8] sm:$0xff]
    %v413 = vld [vmem:[%s1 + $0xae0] sm:$0xff]
    %v414 = vld [vmem:[%s1 + $0xae8] sm:$0xff]
    %v415 = vld [vmem:[%s1 + $0xaf0] sm:$0xff]
    %v416 = vld [vmem:[%s1 + $0xaf8] sm:$0xff]
    %v417 = vld [vmem:[%s1 + $0xb00] sm:$0xff]
    %v418 = vld [vmem:[%s1 + $0xb08] sm:$0xff]
    %v419 = vld [vmem:[%s1 + $0xb10] sm:$0xff]
    %v420 = vld [vmem:[%s1 + $0xb18] sm:$0xff]
    %v421 = vld [vmem:[%s1 + $0xb20] sm:$0xff]
    %v422 = vld [vmem:[%s1 + $0xb28] sm:$0xff]
    %v423 = vld [vmem:[%s1 + $0xb30] sm:$0xff]
    %v424 = vld [vmem:[%s1 + $0xb38] sm:$0xff]
    %v425 = vld [vmem:[%s1 + $0xb40] sm:$0xff]
    %v426 = vld [vmem:[%s1 + $0xb48] sm:$0xff]
    %v427 = vld [vmem:[%s1 + $0xb50] sm:$0xff]
    %v428 = vld [vmem:[%s1 + $0xb58] sm:$0xff]
    %v429 = vld [vmem:[%s1 + $0xb60] sm:$0xff]
    %v430 = vld [vmem:[%s1 + $0xb68] sm:$0xff]
    %v431 = vld [vmem:[%s1 + $0xb70] sm:$0xff]
    %v432 = vld [vmem:[%s1 + $0xb78] sm:$0xff]
    %v433 = vld [vmem:[%s1 + $0xb80] sm:$0xff]
    %v434 = vld [vmem:[%s1 + $0xb88] sm:$0xff]
    %v435 = vld [vmem:[%s1 + $0xb90] sm:$0xff]
    %v436 = vld [vmem:[%s1 + $0xb98] sm:$0xff]
    %v437 = vld [vmem:[%s1 + $0xba0] sm:$0xff]
    %v438 = vld [vmem:[%s1 + $0xba8] sm:$0xff]
    %v439 = vld [vmem:[%s1 + $0xbb0] sm:$0xff]
    %v440 = vld [vmem:[%s1 + $0xbb8] sm:$0xff]
    %v441 = vld [vmem:[%s1 + $0xbc0] sm:$0xff]
    %v442 = vld [vmem:[%s1 + $0xbc8] sm:$0xff]
    %v443 = vld [vmem:[%s1 + $0xbd0] sm:$0xff]
    %v444 = vld [vmem:[%s1 + $0xbd8] sm:$0xff]
    %v445 = vld [vmem:[%s1 + $0xbe0] sm:$0xff]
    %v446 = vld [vmem:[%s1 + $0xbe8] sm:$0xff]
    %v447 = vld [vmem:[%s1 + $0xbf0] sm:$0xff]
    %v448 = vld [vmem:[%s1 + $0xbf8] sm:$0xff]
    %v449 = vld [vmem:[%s1 + $0xc00] sm:$0xff]
    %v450 = vld [vmem:[%s1 + $0xc08] sm:$0xff]
    %v451 = vld [vmem:[%s1 + $0xc10] sm:$0xff]
    %v452 = vld [vmem:[%s1 + $0xc18] sm:$0xff]
    %v453 = vld [vmem:[%s1 + $0xc20] sm:$0xff]
    %v454 = vld [vmem:[%s1 + $0xc28] sm:$0xff]
    %v455 = vld [vmem:[%s1 + $0xc30] sm:$0xff]
    %v456 = vld [vmem:[%s1 + $0xc38] sm:$0xff]
    %v457 = vld [vmem:[%s1 + $0xc40] sm:$0xff]
    %v458 = vld [vmem:[%s1 + $0xc48] sm:$0xff]
    %v459 = vld [vmem:[%s1 + $0xc50] sm:$0xff]
    %v460 = vld [vmem:[%s1 + $0xc58] sm:$0xff]
    %v461 = vld [vmem:[%s1 + $0xc60] sm:$0xff]
    %v462 = vld [vmem:[%s1 + $0xc68] sm:$0xff]
    %v463 = vld [vmem:[%s1 + $0xc70] sm:$0xff]
    %v464 = vld [vmem:[%s1 + $0xc78] sm:$0xff]
    %v465 = vld [vmem:[%s1 + $0xc80] sm:$0xff]
    %v466 = vld [vmem:[%s1 + $0xc88] sm:$0xff]
    %v467 = vld [vmem:[%s1 + $0xc90] sm:$0xff]
    %v468 = vld [vmem:[%s1 + $0xc98] sm:$0xff]
    %v469 = vld [vmem:[%s1 + $0xca0] sm:$0xff]
    %v470 = vld [vmem:[%s1 + $0xca8] sm:$0xff]
    %v471 = vld [vmem:[%s1 + $0xcb0] sm:$0xff]
    %v472 = vld [vmem:[%s1 + $0xcb8] sm:$0xff]
    %v473 = vld [vmem:[%s1 + $0xcc0] sm:$0xff]
    %v474 = vld [vmem:[%s1 + $0xcc8] sm:$0xff]
    %v475 = vld [vmem:[%s1 + $0xcd0] sm:$0xff]
    %v476 = vld [vmem:[%s1 + $0xcd8] sm:$0xff]
    %v477 = vld [vmem:[%s1 + $0xce0] sm:$0xff]
    %v478 = vld [vmem:[%s1 + $0xce8] sm:$0xff]
    %v479 = vld [vmem:[%s1 + $0xcf0] sm:$0xff]
    %v480 = vld [vmem:[%s1 + $0xcf8] sm:$0xff]
    %v481 = vld [vmem:[%s1 + $0xd00] sm:$0xff]
    %v482 = vld [vmem:[%s1 + $0xd08] sm:$0xff]
    %v483 = vld [vmem:[%s1 + $0xd10] sm:$0xff]
    %v484 = vld [vmem:[%s1 + $0xd18] sm:$0xff]
    %v485 = vld [vmem:[%s1 + $0xd20] sm:$0xff]
    %v486 = vld [vmem:[%s1 + $0xd28] sm:$0xff]
    %v487 = vld [vmem:[%s1 + $0xd30] sm:$0xff]
    %v488 = vld [vmem:[%s1 + $0xd38] sm:$0xff]
    %v489 = vld [vmem:[%s1 + $0xd40] sm:$0xff]
    %v490 = vld [vmem:[%s1 + $0xd48] sm:$0xff]
    %v491 = vld [vmem:[%s1 + $0xd50] sm:$0xff]
    %v492 = vld [vmem:[%s1 + $0xd58] sm:$0xff]
    %v493 = vld [vmem:[%s1 + $0xd60] sm:$0xff]
    %v494 = vld [vmem:[%s1 + $0xd68] sm:$0xff]
    %v495 = vld [vmem:[%s1 + $0xd70] sm:$0xff]
    %v496 = vld [vmem:[%s1 + $0xd78] sm:$0xff]
    %v497 = vld [vmem:[%s1 + $0xd80] sm:$0xff]
    %v498 = vld [vmem:[%s1 + $0xd88] sm:$0xff]
    %v499 = vld [vmem:[%s1 + $0xd90] sm:$0xff]
    %v500 = vld [vmem:[%s1 + $0xd98] sm:$0xff]
    %v501 = vld [vmem:[%s1 + $0xda0] sm:$0xff]
    %v502 = vld [vmem:[%s1 + $0xda8] sm:$0xff]
    %v503 = vld [vmem:[%s1 + $0xdb0] sm:$0xff]
    %v504 = vld [vmem:[%s1 + $0xdb8] sm:$0xff]
    %v505 = vld [vmem:[%s1 + $0xdc0] sm:$0xff]
    %v506 = vld [vmem:[%s1 + $0xdc8] sm:$0xff]
    %v507 = vld [vmem:[%s1 + $0xdd0] sm:$0xff]
    %v508 = vld [vmem:[%s1 + $0xdd8] sm:$0xff]
    %v509 = vld [vmem:[%s1 + $0xde0] sm:$0xff]
    %v510 = vld [vmem:[%s1 + $0xde8] sm:$0xff]
    %v511 = vld [vmem:[%s1 + $0xdf0] sm:$0xff]
    %v512 = vld [vmem:[%s1 + $0xdf8] sm:$0xff]
    %v513 = vld [vmem:[%s1 + $0xe00] sm:$0xff]
    %v514 = vld [vmem:[%s1 + $0xe08] sm:$0xff]
    %v515 = vld [vmem:[%s1 + $0xe10] sm:$0xff]
    %v516 = vld [vmem:[%s1 + $0xe18] sm:$0xff]
    %v517 = vld [vmem:[%s1 + $0xe20] sm:$0xff]
    %v518 = vld [vmem:[%s1 + $0xe28] sm:$0xff]
    %v519 = vld [vmem:[%s1 + $0xe30] sm:$0xff]
    %v520 = vld [vmem:[%s1 + $0xe38] sm:$0xff]
    %v521 = vld [vmem:[%s1 + $0xe40] sm:$0xff]
    %v522 = vld [vmem:[%s1 + $0xe48] sm:$0xff]
    %v523 = vld [vmem:[%s1 + $0xe50] sm:$0xff]
    %v524 = vld [vmem:[%s1 + $0xe58] sm:$0xff]
    %v525 = vld [vmem:[%s1 + $0xe60] sm:$0xff]
    %v526 = vld [vmem:[%s1 + $0xe68] sm:$0xff]
    %v527 = vld [vmem:[%s1 + $0xe70] sm:$0xff]
    %v528 = vld [vmem:[%s1 + $0xe78] sm:$0xff]
    %v529 = vld [vmem:[%s1 + $0xe80] sm:$0xff]
    %v530 = vld [vmem:[%s1 + $0xe88] sm:$0xff]
    %v531 = vld [vmem:[%s1 + $0xe90] sm:$0xff]
    %v532 = vld [vmem:[%s1 + $0xe98] sm:$0xff]
    %v533 = vld [vmem:[%s1 + $0xea0] sm:$0xff]
    %v534 = vld [vmem:[%s1 + $0xea8] sm:$0xff]
    %v535 = vld [vmem:[%s1 + $0xeb0] sm:$0xff]
    %v536 = vld [vmem:[%s1 + $0xeb8] sm:$0xff]
    %v537 = vld [vmem:[%s1 + $0xec0] sm:$0xff]
    %v538 = vld [vmem:[%s1 + $0xec8] sm:$0xff]
    %v539 = vld [vmem:[%s1 + $0xed0] sm:$0xff]
    %v540 = vld [vmem:[%s1 + $0xed8] sm:$0xff]
    %v541 = vld [vmem:[%s1 + $0xee0] sm:$0xff]
    %v542 = vld [vmem:[%s1 + $0xee8] sm:$0xff]
    %v543 = vld [vmem:[%s1 + $0xef0] sm:$0xff]
    %v544 = vld [vmem:[%s1 + $0xef8] sm:$0xff]
    %v545 = vld [vmem:[%s1 + $0xf00] sm:$0xff]
    %v546 = vld [vmem:[%s1 + $0xf08] sm:$0xff]
    %v547 = vld [vmem:[%s1 + $0xf10] sm:$0xff]
    %v548 = vld [vmem:[%s1 + $0xf18] sm:$0xff]
    %v549 = vld [vmem:[%s1 + $0xf20] sm:$0xff]
    %v550 = vld [vmem:[%s1 + $0xf28] sm:$0xff]
    %v551 = vld [vmem:[%s1 + $0xf30] sm:$0xff]
    %v552 = vld [vmem:[%s1 + $0xf38] sm:$0xff]
    %v553 = vld [vmem:[%s1 + $0xf40] sm:$0xff]
    %v554 = vld [vmem:[%s1 + $0xf48] sm:$0xff]
    %v555 = vld [vmem:[%s1 + $0xf50] sm:$0xff]
    %v556 = vld [vmem:[%s1 + $0xf58] sm:$0xff]
    %v557 = vld [vmem:[%s1 + $0xf60] sm:$0xff]
    %v558 = vld [vmem:[%s1 + $0xf68] sm:$0xff]
    %v559 = vld [vmem:[%s1 + $0xf70] sm:$0xff]
    %v560 = vld [vmem:[%s1 + $0xf78] sm:$0xff]
    %v561 = vld [vmem:[%s1 + $0xf80] sm:$0xff]
    %v562 = vld [vmem:[%s1 + $0xf88] sm:$0xff]
    %v563 = vld [vmem:[%s1 + $0xf90] sm:$0xff]
    %v564 = vld [vmem:[%s1 + $0xf98] sm:$0xff]
    %v565 = vld [vmem:[%s1 + $0xfa0] sm:$0xff]
    %v566 = vld [vmem:[%s1 + $0xfa8] sm:$0xff]
    %v567 = vld [vmem:[%s1 + $0xfb0] sm:$0xff]
    %v568 = vld [vmem:[%s1 + $0xfb8] sm:$0xff]
    %v569 = vld [vmem:[%s1 + $0xfc0] sm:$0xff]
    %v570 = vld [vmem:[%s1 + $0xfc8] sm:$0xff]
    %v571 = vld [vmem:[%s1 + $0xfd0] sm:$0xff]
    %v572 = vld [vmem:[%s1 + $0xfd8] sm:$0xff]
    %v573 = vld [vmem:[%s1 + $0xfe0] sm:$0xff]
    %v574 = vld [vmem:[%s1 + $0xfe8] sm:$0xff]
    %v575 = vld [vmem:[%s1 + $0xff0] sm:$0xff]
    %v576 = vld [vmem:[%s1 + $0xff8] sm:$0xff]
    %v577 = vld [vmem:[%s1 + $0x1000] sm:$0xff]
    %v578 = vld [vmem:[%s1 + $0x1008] sm:$0xff]
    %v579 = vld [vmem:[%s1 + $0x1010] sm:$0xff]
    %v580 = vld [vmem:[%s1 + $0x1018] sm:$0xff]
    %v581 = vld [vmem:[%s1 + $0x1020] sm:$0xff]
    %v582 = vld [vmem:[%s1 + $0x1028] sm:$0xff]
    %v583 = vld [vmem:[%s1 + $0x1030] sm:$0xff]
    %v584 = vld [vmem:[%s1 + $0x1038] sm:$0xff]
    %v585 = vld [vmem:[%s1 + $0x1040] sm:$0xff]
    %v586 = vld [vmem:[%s1 + $0x1048] sm:$0xff]
    %v587 = vld [vmem:[%s1 + $0x1050] sm:$0xff]
    %v588 = vld [vmem:[%s1 + $0x1058] sm:$0xff]
    %v589 = vld [vmem:[%s1 + $0x1060] sm:$0xff]
    %v590 = vld [vmem:[%s1 + $0x1068] sm:$0xff]
    %v591 = vld [vmem:[%s1 + $0x1070] sm:$0xff]
    %v592 = vld [vmem:[%s1 + $0x1078] sm:$0xff]
    %v593 = vld [vmem:[%s1 + $0x1080] sm:$0xff]
    %v594 = vld [vmem:[%s1 + $0x1088] sm:$0xff]
    %v595 = vld [vmem:[%s1 + $0x1090] sm:$0xff]
    %v596 = vld [vmem:[%s1 + $0x1098] sm:$0xff]
    %v597 = vld [vmem:[%s1 + $0x10a0] sm:$0xff]
    %v598 = vld [vmem:[%s1 + $0x10a8] sm:$0xff]
    %v599 = vld [vmem:[%s1 + $0x10b0] sm:$0xff]
    %v600 = vld [vmem:[%s1 + $0x10b8] sm:$0xff]
    %v601 = vld [vmem:[%s1 + $0x10c0] sm:$0xff]
    %v602 = vld [vmem:[%s1 + $0x10c8] sm:$0xff]
    %v603 = vld [vmem:[%s1 + $0x10d0] sm:$0xff]
    %v604 = vld [vmem:[%s1 + $0x10d8] sm:$0xff]
    %v605 = vld [vmem:[%s1 + $0x10e0] sm:$0xff]
    %v606 = vld [vmem:[%s1 + $0x10e8] sm:$0xff]
    %v607 = vld [vmem:[%s1 + $0x10f0] sm:$0xff]
    %v608 = vld [vmem:[%s1 + $0x10f8] sm:$0xff]
    %v609 = vld [vmem:[%s1 + $0x1100] sm:$0xff]
    %v610 = vld [vmem:[%s1 + $0x1108] sm:$0xff]
    %v611 = vld [vmem:[%s1 + $0x1110] sm:$0xff]
    %v612 = vld [vmem:[%s1 + $0x1118] sm:$0xff]
    %v613 = vld [vmem:[%s1 + $0x1120] sm:$0xff]
    %v614 = vld [vmem:[%s1 + $0x1128] sm:$0xff]
    %v615 = vld [vmem:[%s1 + $0x1130] sm:$0xff]
    %v616 = vld [vmem:[%s1 + $0x1138] sm:$0xff]
    %v617 = vld [vmem:[%s1 + $0x1140] sm:$0xff]
    %v618 = vld [vmem:[%s1 + $0x1148] sm:$0xff]
    %v619 = vld [vmem:[%s1 + $0x1150] sm:$0xff]
    %v620 = vld [vmem:[%s1 + $0x1158] sm:$0xff]
    %v621 = vld [vmem:[%s1 + $0x1160] sm:$0xff]
    %v622 = vld [vmem:[%s1 + $0x1168] sm:$0xff]
    %v623 = vld [vmem:[%s1 + $0x1170] sm:$0xff]
    %v624 = vld [vmem:[%s1 + $0x1178] sm:$0xff]
    %v625 = vld [vmem:[%s1 + $0x1180] sm:$0xff]
    %v626 = vld [vmem:[%s1 + $0x1188] sm:$0xff]
    %v627 = vld [vmem:[%s1 + $0x1190] sm:$0xff]
    %v628 = vld [vmem:[%s1 + $0x1198] sm:$0xff]
    %v629 = vld [vmem:[%s1 + $0x11a0] sm:$0xff]
    %v630 = vld [vmem:[%s1 + $0x11a8] sm:$0xff]
    %v631 = vld [vmem:[%s1 + $0x11b0] sm:$0xff]
    %v632 = vld [vmem:[%s1 + $0x11b8] sm:$0xff]
    %v633 = vld [vmem:[%s1 + $0x11c0] sm:$0xff]
    %v634 = vld [vmem:[%s1 + $0x11c8] sm:$0xff]
    %v635 = vld [vmem:[%s1 + $0x11d0] sm:$0xff]
    %v636 = vld [vmem:[%s1 + $0x11d8] sm:$0xff]
    %v637 = vld [vmem:[%s1 + $0x11e0] sm:$0xff]
    %v638 = vld [vmem:[%s1 + $0x11e8] sm:$0xff]
    %v639 = vld [vmem:[%s1 + $0x11f0] sm:$0xff]
    %v640 = vld [vmem:[%s1 + $0x11f8] sm:$0xff]
    %v641 = vld [vmem:[%s1 + $0x1200] sm:$0xff]
    %v642 = vld [vmem:[%s1 + $0x1208] sm:$0xff]
    %v643 = vld [vmem:[%s1 + $0x1210] sm:$0xff]
    %v644 = vld [vmem:[%s1 + $0x1218] sm:$0xff]
    %v645 = vld [vmem:[%s1 + $0x1220] sm:$0xff]
    %v646 = vld [vmem:[%s1 + $0x1228] sm:$0xff]
    %v647 = vld [vmem:[%s1 + $0x1230] sm:$0xff]
    %v648 = vld [vmem:[%s1 + $0x1238] sm:$0xff]
    %v649 = vld [vmem:[%s1 + $0x1240] sm:$0xff]
    %v650 = vld [vmem:[%s1 + $0x1248] sm:$0xff]
    %v651 = vld [vmem:[%s1 + $0x1250] sm:$0xff]
    %v652 = vld [vmem:[%s1 + $0x1258] sm:$0xff]
    %v653 = vld [vmem:[%s1 + $0x1260] sm:$0xff]
    %v654 = vld [vmem:[%s1 + $0x1268] sm:$0xff]
    %v655 = vld [vmem:[%s1 + $0x1270] sm:$0xff]
    %v656 = vld [vmem:[%s1 + $0x1278] sm:$0xff]
    %v657 = vld [vmem:[%s1 + $0x1280] sm:$0xff]
    %v658 = vld [vmem:[%s1 + $0x1288] sm:$0xff]
    %v659 = vld [vmem:[%s1 + $0x1290] sm:$0xff]
    %v660 = vld [vmem:[%s1 + $0x1298] sm:$0xff]
    %v661 = vld [vmem:[%s1 + $0x12a0] sm:$0xff]
    %v662 = vld [vmem:[%s1 + $0x12a8] sm:$0xff]
    %v663 = vld [vmem:[%s1 + $0x12b0] sm:$0xff]
    %v664 = vld [vmem:[%s1 + $0x12b8] sm:$0xff]
    %v665 = vld [vmem:[%s1 + $0x12c0] sm:$0xff]
    %v666 = vld [vmem:[%s1 + $0x12c8] sm:$0xff]
    %v667 = vld [vmem:[%s1 + $0x12d0] sm:$0xff]
    %v668 = vld [vmem:[%s1 + $0x12d8] sm:$0xff]
    %v669 = vld [vmem:[%s1 + $0x12e0] sm:$0xff]
    %v670 = vld [vmem:[%s1 + $0x12e8] sm:$0xff]
    %v671 = vld [vmem:[%s1 + $0x12f0] sm:$0xff]
    %v672 = vld [vmem:[%s1 + $0x12f8] sm:$0xff]
    %v673 = vld [vmem:[%s1 + $0x1300] sm:$0xff]
    %v674 = vld [vmem:[%s1 + $0x1308] sm:$0xff]
    %v675 = vld [vmem:[%s1 + $0x1310] sm:$0xff]
    %v676 = vld [vmem:[%s1 + $0x1318] sm:$0xff]
    %v677 = vld [vmem:[%s1 + $0x1320] sm:$0xff]
    %v678 = vld [vmem:[%s1 + $0x1328] sm:$0xff]
    %v679 = vld [vmem:[%s1 + $0x1330] sm:$0xff]
    %v680 = vld [vmem:[%s1 + $0x1338] sm:$0xff]
    %v681 = vld [vmem:[%s1 + $0x1340] sm:$0xff]
    %v682 = vld [vmem:[%s1 + $0x1348] sm:$0xff]
    %v683 = vld [vmem:[%s1 + $0x1350] sm:$0xff]
    %v684 = vld [vmem:[%s1 + $0x1358] sm:$0xff]
    %v685 = vld [vmem:[%s1 + $0x1360] sm:$0xff]
    %v686 = vld [vmem:[%s1 + $0x1368] sm:$0xff]
    %v687 = vld [vmem:[%s1 + $0x1370] sm:$0xff]
    %v688 = vld [vmem:[%s1 + $0x1378] sm:$0xff]
    %v689 = vld [vmem:[%s1 + $0x1380] sm:$0xff]
    %v690 = vld [vmem:[%s1 + $0x1388] sm:$0xff]
    %v691 = vld [vmem:[%s1 + $0x1390] sm:$0xff]
    %v692 = vld [vmem:[%s1 + $0x1398] sm:$0xff]
    %v693 = vld [vmem:[%s1 + $0x13a0] sm:$0xff]
    %v694 = vld [vmem:[%s1 + $0x13a8] sm:$0xff]
    %v695 = vld [vmem:[%s1 + $0x13b0] sm:$0xff]
    %v696 = vld [vmem:[%s1 + $0x13b8] sm:$0xff]
    %v697 = vld [vmem:[%s1 + $0x13c0] sm:$0xff]
    %v698 = vld [vmem:[%s1 + $0x13c8] sm:$0xff]
    %v699 = vld [vmem:[%s1 + $0x13d0] sm:$0xff]
    %v700 = vld [vmem:[%s1 + $0x13d8] sm:$0xff]
    %v701 = vld [vmem:[%s1 + $0x13e0] sm:$0xff]
    %v702 = vld [vmem:[%s1 + $0x13e8] sm:$0xff]
    %v703 = vld [vmem:[%s1 + $0x13f0] sm:$0xff]
    %v704 = vld [vmem:[%s1 + $0x13f8] sm:$0xff]
    %v705 = vld [vmem:[%s1 + $0x1400] sm:$0xff]
    %v706 = vld [vmem:[%s1 + $0x1408] sm:$0xff]
    %v707 = vld [vmem:[%s1 + $0x1410] sm:$0xff]
    %v708 = vld [vmem:[%s1 + $0x1418] sm:$0xff]
    %v709 = vld [vmem:[%s1 + $0x1420] sm:$0xff]
    %v710 = vld [vmem:[%s1 + $0x1428] sm:$0xff]
    %v711 = vld [vmem:[%s1 + $0x1430] sm:$0xff]
    %v712 = vld [vmem:[%s1 + $0x1438] sm:$0xff]
    %v713 = vld [vmem:[%s1 + $0x1440] sm:$0xff]
    %v714 = vld [vmem:[%s1 + $0x1448] sm:$0xff]
    %v715 = vld [vmem:[%s1 + $0x1450] sm:$0xff]
    %v716 = vld [vmem:[%s1 + $0x1458] sm:$0xff]
    %v717 = vld [vmem:[%s1 + $0x1460] sm:$0xff]
    %v718 = vld [vmem:[%s1 + $0x1468] sm:$0xff]
    %v719 = vld [vmem:[%s1 + $0x1470] sm:$0xff]
    %v720 = vld [vmem:[%s1 + $0x1478] sm:$0xff]
    %v721 = vld [vmem:[%s1 + $0x1480] sm:$0xff]
    %v722 = vld [vmem:[%s1 + $0x1488] sm:$0xff]
    %v723 = vld [vmem:[%s1 + $0x1490] sm:$0xff]
    %v724 = vld [vmem:[%s1 + $0x1498] sm:$0xff]
    %v725 = vld [vmem:[%s1 + $0x14a0] sm:$0xff]
    %v726 = vld [vmem:[%s1 + $0x14a8] sm:$0xff]
    %v727 = vld [vmem:[%s1 + $0x14b0] sm:$0xff]
    %v728 = vld [vmem:[%s1 + $0x14b8] sm:$0xff]
    %v729 = vld [vmem:[%s1 + $0x14c0] sm:$0xff]
    %v730 = vld [vmem:[%s1 + $0x14c8] sm:$0xff]
    %v731 = vld [vmem:[%s1 + $0x14d0] sm:$0xff]
    %v732 = vld [vmem:[%s1 + $0x14d8] sm:$0xff]
    %v733 = vld [vmem:[%s1 + $0x14e0] sm:$0xff]
    %v734 = vld [vmem:[%s1 + $0x14e8] sm:$0xff]
    %v735 = vld [vmem:[%s1 + $0x14f0] sm:$0xff]
    %v736 = vld [vmem:[%s1 + $0x14f8] sm:$0xff]
    %v737 = vld [vmem:[%s1 + $0x1500] sm:$0xff]
    %v738 = vld [vmem:[%s1 + $0x1508] sm:$0xff]
    %v739 = vld [vmem:[%s1 + $0x1510] sm:$0xff]
    %v740 = vld [vmem:[%s1 + $0x1518] sm:$0xff]
    %v741 = vld [vmem:[%s1 + $0x1520] sm:$0xff]
    %v742 = vld [vmem:[%s1 + $0x1528] sm:$0xff]
    %v743 = vld [vmem:[%s1 + $0x1530] sm:$0xff]
    %v744 = vld [vmem:[%s1 + $0x1538] sm:$0xff]
    %v745 = vld [vmem:[%s1 + $0x1540] sm:$0xff]
    %v746 = vld [vmem:[%s1 + $0x1548] sm:$0xff]
    %v747 = vld [vmem:[%s1 + $0x1550] sm:$0xff]
    %v748 = vld [vmem:[%s1 + $0x1558] sm:$0xff]
    %v749 = vld [vmem:[%s1 + $0x1560] sm:$0xff]
    %v750 = vld [vmem:[%s1 + $0x1568] sm:$0xff]
    %v751 = vld [vmem:[%s1 + $0x1570] sm:$0xff]
    %v752 = vld [vmem:[%s1 + $0x1578] sm:$0xff]
    %v753 = vld [vmem:[%s1 + $0x1580] sm:$0xff]
    %v754 = vld [vmem:[%s1 + $0x1588] sm:$0xff]
    %v755 = vld [vmem:[%s1 + $0x1590] sm:$0xff]
    %v756 = vld [vmem:[%s1 + $0x1598] sm:$0xff]
    %v757 = vld [vmem:[%s1 + $0x15a0] sm:$0xff]
    %v758 = vld [vmem:[%s1 + $0x15a8] sm:$0x7]
    %v759 = vld [vmem:[%s2] sm:$0x1]
    %v761 = vlaneseq
    %v762 = vshrl.u32 %v761, 7
    %v763 = vsub.s32 0, %v762
    %v764 = vrot.slane %v759, %v763
    %vm766 = vcmask 351232
    %v768 = vsel %vm766, %v64, 0
    %vm770 = vcmask 1042432
    %v772 = vsel %vm770, %v758, 0
    %774 = vmatprep.subr.mxu0 0.0
    %775 = vmatpush1.msra.mxu0 %v65
    %776 = vmatprep.subr.mxu0 0.0
    %777 = vmatpush1.msra.mxu0 %v66
    %778 = vmatprep.subr.mxu0 0.0
    %779 = vmatpush1.msra.mxu0 %v67
    %780 = vmatprep.subr.mxu0 0.0
    %781 = vmatpush1.msra.mxu0 %v68
    %782 = vmatprep.subr.mxu0 0.0
    %783 = vmatpush1.msra.mxu0 %v69
    %784 = vmatprep.subr.mxu0 0.0
    %785 = vmatpush1.msra.mxu0 %v70
    %786 = vmatprep.subr.mxu0 0.0
    %787 = vmatpush1.msra.mxu0 %v71
    %788 = vmatprep.subr.mxu0 0.0
    %789 = vmatpush1.msra.mxu0 %v72
    %790 = vmatprep.subr.mxu0 0.0
    %791 = vmatpush1.msra.mxu0 %v73
    %792 = vmatprep.subr.mxu0 0.0
    %793 = vmatpush1.msra.mxu0 %v74
    %794 = vmatprep.subr.mxu0 0.0
    %795 = vmatpush1.msra.mxu0 %v75
    %796 = vmatprep.subr.mxu0 0.0
    %797 = vmatpush1.msra.mxu0 %v76
    %798 = vmatprep.subr.mxu0 0.0
    %799 = vmatpush1.msra.mxu0 %v77
    %800 = vmatprep.subr.mxu0 0.0
    %801 = vmatpush1.msra.mxu0 %v78
    %802 = vmatprep.subr.mxu0 0.0
    %803 = vmatpush1.msra.mxu0 %v79
    %804 = vmatprep.subr.mxu0 0.0
    %805 = vmatpush1.msra.mxu0 %v80
    %806 = vmatprep.subr.mxu0 0.0
    %807 = vmatpush1.msra.mxu0 %v81
    %808 = vmatprep.subr.mxu0 0.0
    %809 = vmatpush1.msra.mxu0 %v82
    %810 = vmatprep.subr.mxu0 0.0
    %811 = vmatpush1.msra.mxu0 %v83
    %812 = vmatprep.subr.mxu0 0.0
    %813 = vmatpush1.msra.mxu0 %v84
    %814 = vmatprep.subr.mxu0 0.0
    %815 = vmatpush1.msra.mxu0 %v85
    %816 = vmatprep.subr.mxu0 0.0
    %817 = vmatpush1.msra.mxu0 %v86
    %818 = vmatprep.subr.mxu0 0.0
    %819 = vmatpush1.msra.mxu0 %v87
    %820 = vmatprep.subr.mxu0 0.0
    %821 = vmatpush1.msra.mxu0 %v88
    %822 = vmatprep.subr.mxu0 0.0
    %823 = vmatpush1.msra.mxu0 %v89
    %824 = vmatprep.subr.mxu0 0.0
    %825 = vmatpush1.msra.mxu0 %v90
    %826 = vmatprep.subr.mxu0 0.0
    %827 = vmatpush1.msra.mxu0 %v91
    %828 = vmatprep.subr.mxu0 0.0
    %829 = vmatpush1.msra.mxu0 %v92
    %830 = vmatprep.subr.mxu0 0.0
    %831 = vmatpush1.msra.mxu0 %v93
    %832 = vmatprep.subr.mxu0 0.0
    %833 = vmatpush1.msra.mxu0 %v94
    %834 = vmatprep.subr.mxu0 0.0
    %835 = vmatpush1.msra.mxu0 %v95
    %836 = vmatprep.subr.mxu0 0.0
    %837 = vmatpush1.msra.mxu0 %v96
    %838 = vmatprep.mubr.f32.mxu0 %v22
    %839 = vmatmul.mubr.f32.gmra.mrb[0].mxu0 %v21
    %v840 = vpop.f32.mrb[0].mxu0
    %v841 = vadd.f32 %v764, %v840
    %v842 = vpop.f32.mrb[0].mxu0
    %843 = vdwg.mxu0
    %844 = vmatprep.subr.mxu0 0.0
    %845 = vmatpush1.msra.mxu0 %v97
    %846 = vmatprep.subr.mxu0 0.0
    %847 = vmatpush1.msra.mxu0 %v98
    %848 = vmatprep.subr.mxu0 0.0
    %849 = vmatpush1.msra.mxu0 %v99
    %850 = vmatprep.subr.mxu0 0.0
    %851 = vmatpush1.msra.mxu0 %v100
    %852 = vmatprep.subr.mxu0 0.0
    %853 = vmatpush1.msra.mxu0 %v101
    %854 = vmatprep.subr.mxu0 0.0
    %855 = vmatpush1.msra.mxu0 %v102
    %856 = vmatprep.subr.mxu0 0.0
    %857 = vmatpush1.msra.mxu0 %v103
    %858 = vmatprep.subr.mxu0 0.0
    %859 = vmatpush1.msra.mxu0 %v104
    %860 = vmatprep.subr.mxu0 0.0
    %861 = vmatpush1.msra.mxu0 %v105
    %862 = vmatprep.subr.mxu0 0.0
    %863 = vmatpush1.msra.mxu0 %v106
    %864 = vmatprep.subr.mxu0 0.0
    %865 = vmatpush1.msra.mxu0 %v107
    %866 = vmatprep.subr.mxu0 0.0
    %867 = vmatpush1.msra.mxu0 %v108
    %868 = vmatprep.subr.mxu0 0.0
    %869 = vmatpush1.msra.mxu0 %v109
    %870 = vmatprep.subr.mxu0 0.0
    %871 = vmatpush1.msra.mxu0 %v110
    %872 = vmatprep.subr.mxu0 0.0
    %873 = vmatpush1.msra.mxu0 %v111
    %874 = vmatprep.subr.mxu0 0.0
    %875 = vmatpush1.msra.mxu0 %v112
    %876 = vmatprep.subr.mxu0 0.0
    %877 = vmatpush1.msra.mxu0 %v113
    %878 = vmatprep.subr.mxu0 0.0
    %879 = vmatpush1.msra.mxu0 %v114
    %880 = vmatprep.subr.mxu0 0.0
    %881 = vmatpush1.msra.mxu0 %v115
    %882 = vmatprep.subr.mxu0 0.0
    %883 = vmatpush1.msra.mxu0 %v116
    %884 = vmatprep.subr.mxu0 0.0
    %885 = vmatpush1.msra.mxu0 %v117
    %886 = vmatprep.subr.mxu0 0.0
    %887 = vmatpush1.msra.mxu0 %v118
    %888 = vmatprep.subr.mxu0 0.0
    %889 = vmatpush1.msra.mxu0 %v119
    %890 = vmatprep.subr.mxu0 0.0
    %891 = vmatpush1.msra.mxu0 %v120
    %892 = vmatprep.subr.mxu0 0.0
    %893 = vmatpush1.msra.mxu0 %v121
    %894 = vmatprep.subr.mxu0 0.0
    %895 = vmatpush1.msra.mxu0 %v122
    %896 = vmatprep.subr.mxu0 0.0
    %897 = vmatpush1.msra.mxu0 %v123
    %898 = vmatprep.subr.mxu0 0.0
    %899 = vmatpush1.msra.mxu0 %v124
    %900 = vmatprep.subr.mxu0 0.0
    %901 = vmatpush1.msra.mxu0 %v125
    %902 = vmatprep.subr.mxu0 0.0
    %903 = vmatpush1.msra.mxu0 %v126
    %904 = vmatprep.subr.mxu0 0.0
    %905 = vmatpush1.msra.mxu0 %v127
    %906 = vmatprep.subr.mxu0 0.0
    %907 = vmatpush1.msra.mxu0 %v128
    %908 = vmatprep.mubr.f32.mxu0 %v24
    %909 = vmatmul.mubr.f32.gmra.mrb[0].mxu0 %v23
    %v910 = vpop.f32.mrb[0].mxu0
    %v911 = vadd.f32 %v841, %v910
    %v912 = vpop.f32.mrb[0].mxu0
    %913 = vdwg.mxu0
    %914 = vmatprep.subr.mxu0 0.0
    %915 = vmatpush1.msra.mxu0 %v129
    %916 = vmatprep.subr.mxu0 0.0
    %917 = vmatpush1.msra.mxu0 %v130
    %918 = vmatprep.subr.mxu0 0.0
    %919 = vmatpush1.msra.mxu0 %v131
    %920 = vmatprep.subr.mxu0 0.0
    %921 = vmatpush1.msra.mxu0 %v132
    %922 = vmatprep.subr.mxu0 0.0
    %923 = vmatpush1.msra.mxu0 %v133
    %924 = vmatprep.subr.mxu0 0.0
    %925 = vmatpush1.msra.mxu0 %v134
    %926 = vmatprep.subr.mxu0 0.0
    %927 = vmatpush1.msra.mxu0 %v135
    %928 = vmatprep.subr.mxu0 0.0
    %929 = vmatpush1.msra.mxu0 %v136
    %930 = vmatprep.subr.mxu0 0.0
    %931 = vmatpush1.msra.mxu0 %v137
    %932 = vmatprep.subr.mxu0 0.0
    %933 = vmatpush1.msra.mxu0 %v138
    %934 = vmatprep.subr.mxu0 0.0
    %935 = vmatpush1.msra.mxu0 %v139
    %936 = vmatprep.subr.mxu0 0.0
    %937 = vmatpush1.msra.mxu0 %v140
    %938 = vmatprep.subr.mxu0 0.0
    %939 = vmatpush1.msra.mxu0 %v141
    %940 = vmatprep.subr.mxu0 0.0
    %941 = vmatpush1.msra.mxu0 %v142
    %942 = vmatprep.subr.mxu0 0.0
    %943 = vmatpush1.msra.mxu0 %v143
    %944 = vmatprep.subr.mxu0 0.0
    %945 = vmatpush1.msra.mxu0 %v144
    %946 = vmatprep.subr.mxu0 0.0
    %947 = vmatpush1.msra.mxu0 %v145
    %948 = vmatprep.subr.mxu0 0.0
    %949 = vmatpush1.msra.mxu0 %v146
    %950 = vmatprep.subr.mxu0 0.0
    %951 = vmatpush1.msra.mxu0 %v147
    %952 = vmatprep.subr.mxu0 0.0
    %953 = vmatpush1.msra.mxu0 %v148
    %954 = vmatprep.subr.mxu0 0.0
    %955 = vmatpush1.msra.mxu0 %v149
    %956 = vmatprep.subr.mxu0 0.0
    %957 = vmatpush1.msra.mxu0 %v150
    %958 = vmatprep.subr.mxu0 0.0
    %959 = vmatpush1.msra.mxu0 %v151
    %960 = vmatprep.subr.mxu0 0.0
    %961 = vmatpush1.msra.mxu0 %v152
    %962 = vmatprep.subr.mxu0 0.0
    %963 = vmatpush1.msra.mxu0 %v153
    %964 = vmatprep.subr.mxu0 0.0
    %965 = vmatpush1.msra.mxu0 %v154
    %966 = vmatprep.subr.mxu0 0.0
    %967 = vmatpush1.msra.mxu0 %v155
    %968 = vmatprep.subr.mxu0 0.0
    %969 = vmatpush1.msra.mxu0 %v156
    %970 = vmatprep.subr.mxu0 0.0
    %971 = vmatpush1.msra.mxu0 %v157
    %972 = vmatprep.subr.mxu0 0.0
    %973 = vmatpush1.msra.mxu0 %v158
    %974 = vmatprep.subr.mxu0 0.0
    %975 = vmatpush1.msra.mxu0 %v159
    %976 = vmatprep.subr.mxu0 0.0
    %977 = vmatpush1.msra.mxu0 %v160
    %978 = vmatprep.mubr.f32.mxu0 %v26
    %979 = vmatmul.mubr.f32.gmra.mrb[0].mxu0 %v25
    %v980 = vpop.f32.mrb[0].mxu0
    %v981 = vadd.f32 %v911, %v980
    %v982 = vpop.f32.mrb[0].mxu0
    %983 = vdwg.mxu0
    %984 = vmatprep.subr.mxu0 0.0
    %985 = vmatpush1.msra.mxu0 %v161
    %986 = vmatprep.subr.mxu0 0.0
    %987 = vmatpush1.msra.mxu0 %v162
    %988 = vmatprep.subr.mxu0 0.0
    %989 = vmatpush1.msra.mxu0 %v163
    %990 = vmatprep.subr.mxu0 0.0
    %991 = vmatpush1.msra.mxu0 %v164
    %992 = vmatprep.subr.mxu0 0.0
    %993 = vmatpush1.msra.mxu0 %v165
    %994 = vmatprep.subr.mxu0 0.0
    %995 = vmatpush1.msra.mxu0 %v166
    %996 = vmatprep.subr.mxu0 0.0
    %997 = vmatpush1.msra.mxu0 %v167
    %998 = vmatprep.subr.mxu0 0.0
    %999 = vmatpush1.msra.mxu0 %v168
    %1000 = vmatprep.subr.mxu0 0.0
    %1001 = vmatpush1.msra.mxu0 %v169
    %1002 = vmatprep.subr.mxu0 0.0
    %1003 = vmatpush1.msra.mxu0 %v170
    %1004 = vmatprep.subr.mxu0 0.0
    %1005 = vmatpush1.msra.mxu0 %v171
    %1006 = vmatprep.subr.mxu0 0.0
    %1007 = vmatpush1.msra.mxu0 %v172
    %1008 = vmatprep.subr.mxu0 0.0
    %1009 = vmatpush1.msra.mxu0 %v173
    %1010 = vmatprep.subr.mxu0 0.0
    %1011 = vmatpush1.msra.mxu0 %v174
    %1012 = vmatprep.subr.mxu0 0.0
    %1013 = vmatpush1.msra.mxu0 %v175
    %1014 = vmatprep.subr.mxu0 0.0
    %1015 = vmatpush1.msra.mxu0 %v176
    %1016 = vmatprep.subr.mxu0 0.0
    %1017 = vmatpush1.msra.mxu0 %v177
    %1018 = vmatprep.subr.mxu0 0.0
    %1019 = vmatpush1.msra.mxu0 %v178
    %1020 = vmatprep.subr.mxu0 0.0
    %1021 = vmatpush1.msra.mxu0 %v179
    %1022 = vmatprep.subr.mxu0 0.0
    %1023 = vmatpush1.msra.mxu0 %v180
    %1024 = vmatprep.subr.mxu0 0.0
    %1025 = vmatpush1.msra.mxu0 %v181
    %1026 = vmatprep.subr.mxu0 0.0
    %1027 = vmatpush1.msra.mxu0 %v182
    %1028 = vmatprep.subr.mxu0 0.0
    %1029 = vmatpush1.msra.mxu0 %v183
    %1030 = vmatprep.subr.mxu0 0.0
    %1031 = vmatpush1.msra.mxu0 %v184
    %1032 = vmatprep.subr.mxu0 0.0
    %1033 = vmatpush1.msra.mxu0 %v185
    %1034 = vmatprep.subr.mxu0 0.0
    %1035 = vmatpush1.msra.mxu0 %v186
    %1036 = vmatprep.subr.mxu0 0.0
    %1037 = vmatpush1.msra.mxu0 %v187
    %1038 = vmatprep.subr.mxu0 0.0
    %1039 = vmatpush1.msra.mxu0 %v188
    %1040 = vmatprep.subr.mxu0 0.0
    %1041 = vmatpush1.msra.mxu0 %v189
    %1042 = vmatprep.subr.mxu0 0.0
    %1043 = vmatpush1.msra.mxu0 %v190
    %1044 = vmatprep.subr.mxu0 0.0
    %1045 = vmatpush1.msra.mxu0 %v191
    %1046 = vmatprep.subr.mxu0 0.0
    %1047 = vmatpush1.msra.mxu0 %v192
    %1048 = vmatprep.mubr.f32.mxu0 %v28
    %1049 = vmatmul.mubr.f32.gmra.mrb[0].mxu0 %v27
    %v1050 = vpop.f32.mrb[0].mxu0
    %v1051 = vadd.f32 %v981, %v1050
    %v1052 = vpop.f32.mrb[0].mxu0
    %1053 = vdwg.mxu0
    %1054 = vmatprep.subr.mxu0 0.0
    %1055 = vmatpush1.msra.mxu0 %v193
    %1056 = vmatprep.subr.mxu0 0.0
    %1057 = vmatpush1.msra.mxu0 %v194
    %1058 = vmatprep.subr.mxu0 0.0
    %1059 = vmatpush1.msra.mxu0 %v195
    %1060 = vmatprep.subr.mxu0 0.0
    %1061 = vmatpush1.msra.mxu0 %v196
    %1062 = vmatprep.subr.mxu0 0.0
    %1063 = vmatpush1.msra.mxu0 %v197
    %1064 = vmatprep.subr.mxu0 0.0
    %1065 = vmatpush1.msra.mxu0 %v198
    %1066 = vmatprep.subr.mxu0 0.0
    %1067 = vmatpush1.msra.mxu0 %v199
    %1068 = vmatprep.subr.mxu0 0.0
    %1069 = vmatpush1.msra.mxu0 %v200
    %1070 = vmatprep.subr.mxu0 0.0
    %1071 = vmatpush1.msra.mxu0 %v201
    %1072 = vmatprep.subr.mxu0 0.0
    %1073 = vmatpush1.msra.mxu0 %v202
    %1074 = vmatprep.subr.mxu0 0.0
    %1075 = vmatpush1.msra.mxu0 %v203
    %1076 = vmatprep.subr.mxu0 0.0
    %1077 = vmatpush1.msra.mxu0 %v204
    %1078 = vmatprep.subr.mxu0 0.0
    %1079 = vmatpush1.msra.mxu0 %v205
    %1080 = vmatprep.subr.mxu0 0.0
    %1081 = vmatpush1.msra.mxu0 %v206
    %1082 = vmatprep.subr.mxu0 0.0
    %1083 = vmatpush1.msra.mxu0 %v207
    %1084 = vmatprep.subr.mxu0 0.0
    %1085 = vmatpush1.msra.mxu0 %v208
    %1086 = vmatprep.subr.mxu0 0.0
    %1087 = vmatpush1.msra.mxu0 %v209
    %1088 = vmatprep.subr.mxu0 0.0
    %1089 = vmatpush1.msra.mxu0 %v210
    %1090 = vmatprep.subr.mxu0 0.0
    %1091 = vmatpush1.msra.mxu0 %v211
    %1092 = vmatprep.subr.mxu0 0.0
    %1093 = vmatpush1.msra.mxu0 %v212
    %1094 = vmatprep.subr.mxu0 0.0
    %1095 = vmatpush1.msra.mxu0 %v213
    %1096 = vmatprep.subr.mxu0 0.0
    %1097 = vmatpush1.msra.mxu0 %v214
    %1098 = vmatprep.subr.mxu0 0.0
    %1099 = vmatpush1.msra.mxu0 %v215
    %1100 = vmatprep.subr.mxu0 0.0
    %1101 = vmatpush1.msra.mxu0 %v216
    %1102 = vmatprep.subr.mxu0 0.0
    %1103 = vmatpush1.msra.mxu0 %v217
    %1104 = vmatprep.subr.mxu0 0.0
    %1105 = vmatpush1.msra.mxu0 %v218
    %1106 = vmatprep.subr.mxu0 0.0
    %1107 = vmatpush1.msra.mxu0 %v219
    %1108 = vmatprep.subr.mxu0 0.0
    %1109 = vmatpush1.msra.mxu0 %v220
    %1110 = vmatprep.subr.mxu0 0.0
    %1111 = vmatpush1.msra.mxu0 %v221
    %1112 = vmatprep.subr.mxu0 0.0
    %1113 = vmatpush1.msra.mxu0 %v222
    %1114 = vmatprep.subr.mxu0 0.0
    %1115 = vmatpush1.msra.mxu0 %v223
    %1116 = vmatprep.subr.mxu0 0.0
    %1117 = vmatpush1.msra.mxu0 %v224
    %1118 = vmatprep.mubr.f32.mxu0 %v30
    %1119 = vmatmul.mubr.f32.gmra.mrb[0].mxu0 %v29
    %v1120 = vpop.f32.mrb[0].mxu0
    %v1121 = vadd.f32 %v1051, %v1120
    %v1122 = vpop.f32.mrb[0].mxu0
    %1123 = vdwg.mxu0
    %1124 = vmatprep.subr.mxu0 0.0
    %1125 = vmatpush1.msra.mxu0 %v225
    %1126 = vmatprep.subr.mxu0 0.0
    %1127 = vmatpush1.msra.mxu0 %v226
    %1128 = vmatprep.subr.mxu0 0.0
    %1129 = vmatpush1.msra.mxu0 %v227
    %1130 = vmatprep.subr.mxu0 0.0
    %1131 = vmatpush1.msra.mxu0 %v228
    %1132 = vmatprep.subr.mxu0 0.0
    %1133 = vmatpush1.msra.mxu0 %v229
    %1134 = vmatprep.subr.mxu0 0.0
    %1135 = vmatpush1.msra.mxu0 %v230
    %1136 = vmatprep.subr.mxu0 0.0
    %1137 = vmatpush1.msra.mxu0 %v231
    %1138 = vmatprep.subr.mxu0 0.0
    %1139 = vmatpush1.msra.mxu0 %v232
    %1140 = vmatprep.subr.mxu0 0.0
    %1141 = vmatpush1.msra.mxu0 %v233
    %1142 = vmatprep.subr.mxu0 0.0
    %1143 = vmatpush1.msra.mxu0 %v234
    %1144 = vmatprep.subr.mxu0 0.0
    %1145 = vmatpush1.msra.mxu0 %v235
    %1146 = vmatprep.subr.mxu0 0.0
    %1147 = vmatpush1.msra.mxu0 %v236
    %1148 = vmatprep.subr.mxu0 0.0
    %1149 = vmatpush1.msra.mxu0 %v237
    %1150 = vmatprep.subr.mxu0 0.0
    %1151 = vmatpush1.msra.mxu0 %v238
    %1152 = vmatprep.subr.mxu0 0.0
    %1153 = vmatpush1.msra.mxu0 %v239
    %1154 = vmatprep.subr.mxu0 0.0
    %1155 = vmatpush1.msra.mxu0 %v240
    %1156 = vmatprep.subr.mxu0 0.0
    %1157 = vmatpush1.msra.mxu0 %v241
    %1158 = vmatprep.subr.mxu0 0.0
    %1159 = vmatpush1.msra.mxu0 %v242
    %1160 = vmatprep.subr.mxu0 0.0
    %1161 = vmatpush1.msra.mxu0 %v243
    %1162 = vmatprep.subr.mxu0 0.0
    %1163 = vmatpush1.msra.mxu0 %v244
    %1164 = vmatprep.subr.mxu0 0.0
    %1165 = vmatpush1.msra.mxu0 %v245
    %1166 = vmatprep.subr.mxu0 0.0
    %1167 = vmatpush1.msra.mxu0 %v246
    %1168 = vmatprep.subr.mxu0 0.0
    %1169 = vmatpush1.msra.mxu0 %v247
    %1170 = vmatprep.subr.mxu0 0.0
    %1171 = vmatpush1.msra.mxu0 %v248
    %1172 = vmatprep.subr.mxu0 0.0
    %1173 = vmatpush1.msra.mxu0 %v249
    %1174 = vmatprep.subr.mxu0 0.0
    %1175 = vmatpush1.msra.mxu0 %v250
    %1176 = vmatprep.subr.mxu0 0.0
    %1177 = vmatpush1.msra.mxu0 %v251
    %1178 = vmatprep.subr.mxu0 0.0
    %1179 = vmatpush1.msra.mxu0 %v252
    %1180 = vmatprep.subr.mxu0 0.0
    %1181 = vmatpush1.msra.mxu0 %v253
    %1182 = vmatprep.subr.mxu0 0.0
    %1183 = vmatpush1.msra.mxu0 %v254
    %1184 = vmatprep.subr.mxu0 0.0
    %1185 = vmatpush1.msra.mxu0 %v255
    %1186 = vmatprep.subr.mxu0 0.0
    %1187 = vmatpush1.msra.mxu0 %v256
    %1188 = vmatprep.mubr.f32.mxu0 %v32
    %1189 = vmatmul.mubr.f32.gmra.mrb[0].mxu0 %v31
    %v1190 = vpop.f32.mrb[0].mxu0
    %v1191 = vadd.f32 %v1121, %v1190
    %v1192 = vpop.f32.mrb[0].mxu0
    %1193 = vdwg.mxu0
    %1194 = vmatprep.subr.mxu0 0.0
    %1195 = vmatpush1.msra.mxu0 %v257
    %1196 = vmatprep.subr.mxu0 0.0
    %1197 = vmatpush1.msra.mxu0 %v258
    %1198 = vmatprep.subr.mxu0 0.0
    %1199 = vmatpush1.msra.mxu0 %v259
    %1200 = vmatprep.subr.mxu0 0.0
    %1201 = vmatpush1.msra.mxu0 %v260
    %1202 = vmatprep.subr.mxu0 0.0
    %1203 = vmatpush1.msra.mxu0 %v261
    %1204 = vmatprep.subr.mxu0 0.0
    %1205 = vmatpush1.msra.mxu0 %v262
    %1206 = vmatprep.subr.mxu0 0.0
    %1207 = vmatpush1.msra.mxu0 %v263
    %1208 = vmatprep.subr.mxu0 0.0
    %1209 = vmatpush1.msra.mxu0 %v264
    %1210 = vmatprep.subr.mxu0 0.0
    %1211 = vmatpush1.msra.mxu0 %v265
    %1212 = vmatprep.subr.mxu0 0.0
    %1213 = vmatpush1.msra.mxu0 %v266
    %1214 = vmatprep.subr.mxu0 0.0
    %1215 = vmatpush1.msra.mxu0 %v267
    %1216 = vmatprep.subr.mxu0 0.0
    %1217 = vmatpush1.msra.mxu0 %v268
    %1218 = vmatprep.subr.mxu0 0.0
    %1219 = vmatpush1.msra.mxu0 %v269
    %1220 = vmatprep.subr.mxu0 0.0
    %1221 = vmatpush1.msra.mxu0 %v270
    %1222 = vmatprep.subr.mxu0 0.0
    %1223 = vmatpush1.msra.mxu0 %v271
    %1224 = vmatprep.subr.mxu0 0.0
    %1225 = vmatpush1.msra.mxu0 %v272
    %1226 = vmatprep.subr.mxu0 0.0
    %1227 = vmatpush1.msra.mxu0 %v273
    %1228 = vmatprep.subr.mxu0 0.0
    %1229 = vmatpush1.msra.mxu0 %v274
    %1230 = vmatprep.subr.mxu0 0.0
    %1231 = vmatpush1.msra.mxu0 %v275
    %1232 = vmatprep.subr.mxu0 0.0
    %1233 = vmatpush1.msra.mxu0 %v276
    %1234 = vmatprep.subr.mxu0 0.0
    %1235 = vmatpush1.msra.mxu0 %v277
    %1236 = vmatprep.subr.mxu0 0.0
    %1237 = vmatpush1.msra.mxu0 %v278
    %1238 = vmatprep.subr.mxu0 0.0
    %1239 = vmatpush1.msra.mxu0 %v279
    %1240 = vmatprep.subr.mxu0 0.0
    %1241 = vmatpush1.msra.mxu0 %v280
    %1242 = vmatprep.subr.mxu0 0.0
    %1243 = vmatpush1.msra.mxu0 %v281
    %1244 = vmatprep.subr.mxu0 0.0
    %1245 = vmatpush1.msra.mxu0 %v282
    %1246 = vmatprep.subr.mxu0 0.0
    %1247 = vmatpush1.msra.mxu0 %v283
    %1248 = vmatprep.subr.mxu0 0.0
    %1249 = vmatpush1.msra.mxu0 %v284
    %1250 = vmatprep.subr.mxu0 0.0
    %1251 = vmatpush1.msra.mxu0 %v285
    %1252 = vmatprep.subr.mxu0 0.0
    %1253 = vmatpush1.msra.mxu0 %v286
    %1254 = vmatprep.subr.mxu0 0.0
    %1255 = vmatpush1.msra.mxu0 %v287
    %1256 = vmatprep.subr.mxu0 0.0
    %1257 = vmatpush1.msra.mxu0 %v288
    %1258 = vmatprep.mubr.f32.mxu0 %v34
    %1259 = vmatmul.mubr.f32.gmra.mrb[0].mxu0 %v33
    %v1260 = vpop.f32.mrb[0].mxu0
    %v1261 = vadd.f32 %v1191, %v1260
    %v1262 = vpop.f32.mrb[0].mxu0
    %1263 = vdwg.mxu0
    %1264 = vmatprep.subr.mxu0 0.0
    %1265 = vmatpush1.msra.mxu0 %v289
    %1266 = vmatprep.subr.mxu0 0.0
    %1267 = vmatpush1.msra.mxu0 %v290
    %1268 = vmatprep.subr.mxu0 0.0
    %1269 = vmatpush1.msra.mxu0 %v291
    %1270 = vmatprep.subr.mxu0 0.0
    %1271 = vmatpush1.msra.mxu0 %v292
    %1272 = vmatprep.subr.mxu0 0.0
    %1273 = vmatpush1.msra.mxu0 %v293
    %1274 = vmatprep.subr.mxu0 0.0
    %1275 = vmatpush1.msra.mxu0 %v294
    %1276 = vmatprep.subr.mxu0 0.0
    %1277 = vmatpush1.msra.mxu0 %v295
    %1278 = vmatprep.subr.mxu0 0.0
    %1279 = vmatpush1.msra.mxu0 %v296
    %1280 = vmatprep.subr.mxu0 0.0
    %1281 = vmatpush1.msra.mxu0 %v297
    %1282 = vmatprep.subr.mxu0 0.0
    %1283 = vmatpush1.msra.mxu0 %v298
    %1284 = vmatprep.subr.mxu0 0.0
    %1285 = vmatpush1.msra.mxu0 %v299
    %1286 = vmatprep.subr.mxu0 0.0
    %1287 = vmatpush1.msra.mxu0 %v300
    %1288 = vmatprep.subr.mxu0 0.0
    %1289 = vmatpush1.msra.mxu0 %v301
    %1290 = vmatprep.subr.mxu0 0.0
    %1291 = vmatpush1.msra.mxu0 %v302
    %1292 = vmatprep.subr.mxu0 0.0
    %1293 = vmatpush1.msra.mxu0 %v303
    %1294 = vmatprep.subr.mxu0 0.0
    %1295 = vmatpush1.msra.mxu0 %v304
    %1296 = vmatprep.subr.mxu0 0.0
    %1297 = vmatpush1.msra.mxu0 %v305
    %1298 = vmatprep.subr.mxu0 0.0
    %1299 = vmatpush1.msra.mxu0 %v306
    %1300 = vmatprep.subr.mxu0 0.0
    %1301 = vmatpush1.msra.mxu0 %v307
    %1302 = vmatprep.subr.mxu0 0.0
    %1303 = vmatpush1.msra.mxu0 %v308
    %1304 = vmatprep.subr.mxu0 0.0
    %1305 = vmatpush1.msra.mxu0 %v309
    %1306 = vmatprep.subr.mxu0 0.0
    %1307 = vmatpush1.msra.mxu0 %v310
    %1308 = vmatprep.subr.mxu0 0.0
    %1309 = vmatpush1.msra.mxu0 %v311
    %1310 = vmatprep.subr.mxu0 0.0
    %1311 = vmatpush1.msra.mxu0 %v312
    %1312 = vmatprep.subr.mxu0 0.0
    %1313 = vmatpush1.msra.mxu0 %v313
    %1314 = vmatprep.subr.mxu0 0.0
    %1315 = vmatpush1.msra.mxu0 %v314
    %1316 = vmatprep.subr.mxu0 0.0
    %1317 = vmatpush1.msra.mxu0 %v315
    %1318 = vmatprep.subr.mxu0 0.0
    %1319 = vmatpush1.msra.mxu0 %v316
    %1320 = vmatprep.subr.mxu0 0.0
    %1321 = vmatpush1.msra.mxu0 %v317
    %1322 = vmatprep.subr.mxu0 0.0
    %1323 = vmatpush1.msra.mxu0 %v318
    %1324 = vmatprep.subr.mxu0 0.0
    %1325 = vmatpush1.msra.mxu0 %v319
    %1326 = vmatprep.subr.mxu0 0.0
    %1327 = vmatpush1.msra.mxu0 %v320
    %1328 = vmatprep.mubr.f32.mxu0 %v36
    %1329 = vmatmul.mubr.f32.gmra.mrb[0].mxu0 %v35
    %v1330 = vpop.f32.mrb[0].mxu0
    %v1331 = vadd.f32 %v1261, %v1330
    %v1332 = vpop.f32.mrb[0].mxu0
    %1333 = vdwg.mxu0
    %1334 = vmatprep.subr.mxu0 0.0
    %1335 = vmatpush1.msra.mxu0 %v321
    %1336 = vmatprep.subr.mxu0 0.0
    %1337 = vmatpush1.msra.mxu0 %v322
    %1338 = vmatprep.subr.mxu0 0.0
    %1339 = vmatpush1.msra.mxu0 %v323
    %1340 = vmatprep.subr.mxu0 0.0
    %1341 = vmatpush1.msra.mxu0 %v324
    %1342 = vmatprep.subr.mxu0 0.0
    %1343 = vmatpush1.msra.mxu0 %v325
    %1344 = vmatprep.subr.mxu0 0.0
    %1345 = vmatpush1.msra.mxu0 %v326
    %1346 = vmatprep.subr.mxu0 0.0
    %1347 = vmatpush1.msra.mxu0 %v327
    %1348 = vmatprep.subr.mxu0 0.0
    %1349 = vmatpush1.msra.mxu0 %v328
    %1350 = vmatprep.subr.mxu0 0.0
    %1351 = vmatpush1.msra.mxu0 %v329
    %1352 = vmatprep.subr.mxu0 0.0
    %1353 = vmatpush1.msra.mxu0 %v330
    %1354 = vmatprep.subr.mxu0 0.0
    %1355 = vmatpush1.msra.mxu0 %v331
    %1356 = vmatprep.subr.mxu0 0.0
    %1357 = vmatpush1.msra.mxu0 %v332
    %1358 = vmatprep.subr.mxu0 0.0
    %1359 = vmatpush1.msra.mxu0 %v333
    %1360 = vmatprep.subr.mxu0 0.0
    %1361 = vmatpush1.msra.mxu0 %v334
    %1362 = vmatprep.subr.mxu0 0.0
    %1363 = vmatpush1.msra.mxu0 %v335
    %1364 = vmatprep.subr.mxu0 0.0
    %1365 = vmatpush1.msra.mxu0 %v336
    %1366 = vmatprep.subr.mxu0 0.0
    %1367 = vmatpush1.msra.mxu0 %v337
    %1368 = vmatprep.subr.mxu0 0.0
    %1369 = vmatpush1.msra.mxu0 %v338
    %1370 = vmatprep.subr.mxu0 0.0
    %1371 = vmatpush1.msra.mxu0 %v339
    %1372 = vmatprep.subr.mxu0 0.0
    %1373 = vmatpush1.msra.mxu0 %v340
    %1374 = vmatprep.subr.mxu0 0.0
    %1375 = vmatpush1.msra.mxu0 %v341
    %1376 = vmatprep.subr.mxu0 0.0
    %1377 = vmatpush1.msra.mxu0 %v342
    %1378 = vmatprep.subr.mxu0 0.0
    %1379 = vmatpush1.msra.mxu0 %v343
    %1380 = vmatprep.subr.mxu0 0.0
    %1381 = vmatpush1.msra.mxu0 %v344
    %1382 = vmatprep.subr.mxu0 0.0
    %1383 = vmatpush1.msra.mxu0 %v345
    %1384 = vmatprep.subr.mxu0 0.0
    %1385 = vmatpush1.msra.mxu0 %v346
    %1386 = vmatprep.subr.mxu0 0.0
    %1387 = vmatpush1.msra.mxu0 %v347
    %1388 = vmatprep.subr.mxu0 0.0
    %1389 = vmatpush1.msra.mxu0 %v348
    %1390 = vmatprep.subr.mxu0 0.0
    %1391 = vmatpush1.msra.mxu0 %v349
    %1392 = vmatprep.subr.mxu0 0.0
    %1393 = vmatpush1.msra.mxu0 %v350
    %1394 = vmatprep.subr.mxu0 0.0
    %1395 = vmatpush1.msra.mxu0 %v351
    %1396 = vmatprep.subr.mxu0 0.0
    %1397 = vmatpush1.msra.mxu0 %v352
    %1398 = vmatprep.mubr.f32.mxu0 %v38
    %1399 = vmatmul.mubr.f32.gmra.mrb[0].mxu0 %v37
    %v1400 = vpop.f32.mrb[0].mxu0
    %v1401 = vadd.f32 %v1331, %v1400
    %v1402 = vpop.f32.mrb[0].mxu0
    %1403 = vdwg.mxu0
    %1404 = vmatprep.subr.mxu0 0.0
    %1405 = vmatpush1.msra.mxu0 %v353
    %1406 = vmatprep.subr.mxu0 0.0
    %1407 = vmatpush1.msra.mxu0 %v354
    %1408 = vmatprep.subr.mxu0 0.0
    %1409 = vmatpush1.msra.mxu0 %v355
    %1410 = vmatprep.subr.mxu0 0.0
    %1411 = vmatpush1.msra.mxu0 %v356
    %1412 = vmatprep.subr.mxu0 0.0
    %1413 = vmatpush1.msra.mxu0 %v357
    %1414 = vmatprep.subr.mxu0 0.0
    %1415 = vmatpush1.msra.mxu0 %v358
    %1416 = vmatprep.subr.mxu0 0.0
    %1417 = vmatpush1.msra.mxu0 %v359
    %1418 = vmatprep.subr.mxu0 0.0
    %1419 = vmatpush1.msra.mxu0 %v360
    %1420 = vmatprep.subr.mxu0 0.0
    %1421 = vmatpush1.msra.mxu0 %v361
    %1422 = vmatprep.subr.mxu0 0.0
    %1423 = vmatpush1.msra.mxu0 %v362
    %1424 = vmatprep.subr.mxu0 0.0
    %1425 = vmatpush1.msra.mxu0 %v363
    %1426 = vmatprep.subr.mxu0 0.0
    %1427 = vmatpush1.msra.mxu0 %v364
    %1428 = vmatprep.subr.mxu0 0.0
    %1429 = vmatpush1.msra.mxu0 %v365
    %1430 = vmatprep.subr.mxu0 0.0
    %1431 = vmatpush1.msra.mxu0 %v366
    %1432 = vmatprep.subr.mxu0 0.0
    %1433 = vmatpush1.msra.mxu0 %v367
    %1434 = vmatprep.subr.mxu0 0.0
    %1435 = vmatpush1.msra.mxu0 %v368
    %1436 = vmatprep.subr.mxu0 0.0
    %1437 = vmatpush1.msra.mxu0 %v369
    %1438 = vmatprep.subr.mxu0 0.0
    %1439 = vmatpush1.msra.mxu0 %v370
    %1440 = vmatprep.subr.mxu0 0.0
    %1441 = vmatpush1.msra.mxu0 %v371
    %1442 = vmatprep.subr.mxu0 0.0
    %1443 = vmatpush1.msra.mxu0 %v372
    %1444 = vmatprep.subr.mxu0 0.0
    %1445 = vmatpush1.msra.mxu0 %v373
    %1446 = vmatprep.subr.mxu0 0.0
    %1447 = vmatpush1.msra.mxu0 %v374
    %1448 = vmatprep.subr.mxu0 0.0
    %1449 = vmatpush1.msra.mxu0 %v375
    %1450 = vmatprep.subr.mxu0 0.0
    %1451 = vmatpush1.msra.mxu0 %v376
    %1452 = vmatprep.subr.mxu0 0.0
    %1453 = vmatpush1.msra.mxu0 %v377
    %1454 = vmatprep.subr.mxu0 0.0
    %1455 = vmatpush1.msra.mxu0 %v378
    %1456 = vmatprep.subr.mxu0 0.0
    %1457 = vmatpush1.msra.mxu0 %v379
    %1458 = vmatprep.subr.mxu0 0.0
    %1459 = vmatpush1.msra.mxu0 %v380
    %1460 = vmatprep.subr.mxu0 0.0
    %1461 = vmatpush1.msra.mxu0 %v381
    %1462 = vmatprep.subr.mxu0 0.0
    %1463 = vmatpush1.msra.mxu0 %v382
    %1464 = vmatprep.subr.mxu0 0.0
    %1465 = vmatpush1.msra.mxu0 %v383
    %1466 = vmatprep.subr.mxu0 0.0
    %1467 = vmatpush1.msra.mxu0 %v384
    %1468 = vmatprep.mubr.f32.mxu0 %v40
    %1469 = vmatmul.mubr.f32.gmra.mrb[0].mxu0 %v39
    %v1470 = vpop.f32.mrb[0].mxu0
    %v1471 = vadd.f32 %v1401, %v1470
    %v1472 = vpop.f32.mrb[0].mxu0
    %1473 = vdwg.mxu0
    %1474 = vmatprep.subr.mxu0 0.0
    %1475 = vmatpush1.msra.mxu0 %v385
    %1476 = vmatprep.subr.mxu0 0.0
    %1477 = vmatpush1.msra.mxu0 %v386
    %1478 = vmatprep.subr.mxu0 0.0
    %1479 = vmatpush1.msra.mxu0 %v387
    %1480 = vmatprep.subr.mxu0 0.0
    %1481 = vmatpush1.msra.mxu0 %v388
    %1482 = vmatprep.subr.mxu0 0.0
    %1483 = vmatpush1.msra.mxu0 %v389
    %1484 = vmatprep.subr.mxu0 0.0
    %1485 = vmatpush1.msra.mxu0 %v390
    %1486 = vmatprep.subr.mxu0 0.0
    %1487 = vmatpush1.msra.mxu0 %v391
    %1488 = vmatprep.subr.mxu0 0.0
    %1489 = vmatpush1.msra.mxu0 %v392
    %1490 = vmatprep.subr.mxu0 0.0
    %1491 = vmatpush1.msra.mxu0 %v393
    %1492 = vmatprep.subr.mxu0 0.0
    %1493 = vmatpush1.msra.mxu0 %v394
    %1494 = vmatprep.subr.mxu0 0.0
    %1495 = vmatpush1.msra.mxu0 %v395
    %1496 = vmatprep.subr.mxu0 0.0
    %1497 = vmatpush1.msra.mxu0 %v396
    %1498 = vmatprep.subr.mxu0 0.0
    %1499 = vmatpush1.msra.mxu0 %v397
    %1500 = vmatprep.subr.mxu0 0.0
    %1501 = vmatpush1.msra.mxu0 %v398
    %1502 = vmatprep.subr.mxu0 0.0
    %1503 = vmatpush1.msra.mxu0 %v399
    %1504 = vmatprep.subr.mxu0 0.0
    %1505 = vmatpush1.msra.mxu0 %v400
    %1506 = vmatprep.subr.mxu0 0.0
    %1507 = vmatpush1.msra.mxu0 %v401
    %1508 = vmatprep.subr.mxu0 0.0
    %1509 = vmatpush1.msra.mxu0 %v402
    %1510 = vmatprep.subr.mxu0 0.0
    %1511 = vmatpush1.msra.mxu0 %v403
    %1512 = vmatprep.subr.mxu0 0.0
    %1513 = vmatpush1.msra.mxu0 %v404
    %1514 = vmatprep.subr.mxu0 0.0
    %1515 = vmatpush1.msra.mxu0 %v405
    %1516 = vmatprep.subr.mxu0 0.0
    %1517 = vmatpush1.msra.mxu0 %v406
    %1518 = vmatprep.subr.mxu0 0.0
    %1519 = vmatpush1.msra.mxu0 %v407
    %1520 = vmatprep.subr.mxu0 0.0
    %1521 = vmatpush1.msra.mxu0 %v408
    %1522 = vmatprep.subr.mxu0 0.0
    %1523 = vmatpush1.msra.mxu0 %v409
    %1524 = vmatprep.subr.mxu0 0.0
    %1525 = vmatpush1.msra.mxu0 %v410
    %1526 = vmatprep.subr.mxu0 0.0
    %1527 = vmatpush1.msra.mxu0 %v411
    %1528 = vmatprep.subr.mxu0 0.0
    %1529 = vmatpush1.msra.mxu0 %v412
    %1530 = vmatprep.subr.mxu0 0.0
    %1531 = vmatpush1.msra.mxu0 %v413
    %1532 = vmatprep.subr.mxu0 0.0
    %1533 = vmatpush1.msra.mxu0 %v414
    %1534 = vmatprep.subr.mxu0 0.0
    %1535 = vmatpush1.msra.mxu0 %v415
    %1536 = vmatprep.subr.mxu0 0.0
    %1537 = vmatpush1.msra.mxu0 %v416
    %1538 = vmatprep.mubr.f32.mxu0 %v42
    %1539 = vmatmul.mubr.f32.gmra.mrb[0].mxu0 %v41
    %v1540 = vpop.f32.mrb[0].mxu0
    %v1541 = vadd.f32 %v1471, %v1540
    %v1542 = vpop.f32.mrb[0].mxu0
    %1543 = vdwg.mxu0
    %1544 = vmatprep.subr.mxu0 0.0
    %1545 = vmatpush1.msra.mxu0 %v417
    %1546 = vmatprep.subr.mxu0 0.0
    %1547 = vmatpush1.msra.mxu0 %v418
    %1548 = vmatprep.subr.mxu0 0.0
    %1549 = vmatpush1.msra.mxu0 %v419
    %1550 = vmatprep.subr.mxu0 0.0
    %1551 = vmatpush1.msra.mxu0 %v420
    %1552 = vmatprep.subr.mxu0 0.0
    %1553 = vmatpush1.msra.mxu0 %v421
    %1554 = vmatprep.subr.mxu0 0.0
    %1555 = vmatpush1.msra.mxu0 %v422
    %1556 = vmatprep.subr.mxu0 0.0
    %1557 = vmatpush1.msra.mxu0 %v423
    %1558 = vmatprep.subr.mxu0 0.0
    %1559 = vmatpush1.msra.mxu0 %v424
    %1560 = vmatprep.subr.mxu0 0.0
    %1561 = vmatpush1.msra.mxu0 %v425
    %1562 = vmatprep.subr.mxu0 0.0
    %1563 = vmatpush1.msra.mxu0 %v426
    %1564 = vmatprep.subr.mxu0 0.0
    %1565 = vmatpush1.msra.mxu0 %v427
    %1566 = vmatprep.subr.mxu0 0.0
    %1567 = vmatpush1.msra.mxu0 %v428
    %1568 = vmatprep.subr.mxu0 0.0
    %1569 = vmatpush1.msra.mxu0 %v429
    %1570 = vmatprep.subr.mxu0 0.0
    %1571 = vmatpush1.msra.mxu0 %v430
    %1572 = vmatprep.subr.mxu0 0.0
    %1573 = vmatpush1.msra.mxu0 %v431
    %1574 = vmatprep.subr.mxu0 0.0
    %1575 = vmatpush1.msra.mxu0 %v432
    %1576 = vmatprep.subr.mxu0 0.0
    %1577 = vmatpush1.msra.mxu0 %v433
    %1578 = vmatprep.subr.mxu0 0.0
    %1579 = vmatpush1.msra.mxu0 %v434
    %1580 = vmatprep.subr.mxu0 0.0
    %1581 = vmatpush1.msra.mxu0 %v435
    %1582 = vmatprep.subr.mxu0 0.0
    %1583 = vmatpush1.msra.mxu0 %v436
    %1584 = vmatprep.subr.mxu0 0.0
    %1585 = vmatpush1.msra.mxu0 %v437
    %1586 = vmatprep.subr.mxu0 0.0
    %1587 = vmatpush1.msra.mxu0 %v438
    %1588 = vmatprep.subr.mxu0 0.0
    %1589 = vmatpush1.msra.mxu0 %v439
    %1590 = vmatprep.subr.mxu0 0.0
    %1591 = vmatpush1.msra.mxu0 %v440
    %1592 = vmatprep.subr.mxu0 0.0
    %1593 = vmatpush1.msra.mxu0 %v441
    %1594 = vmatprep.subr.mxu0 0.0
    %1595 = vmatpush1.msra.mxu0 %v442
    %1596 = vmatprep.subr.mxu0 0.0
    %1597 = vmatpush1.msra.mxu0 %v443
    %1598 = vmatprep.subr.mxu0 0.0
    %1599 = vmatpush1.msra.mxu0 %v444
    %1600 = vmatprep.subr.mxu0 0.0
    %1601 = vmatpush1.msra.mxu0 %v445
    %1602 = vmatprep.subr.mxu0 0.0
    %1603 = vmatpush1.msra.mxu0 %v446
    %1604 = vmatprep.subr.mxu0 0.0
    %1605 = vmatpush1.msra.mxu0 %v447
    %1606 = vmatprep.subr.mxu0 0.0
    %1607 = vmatpush1.msra.mxu0 %v448
    %1608 = vmatprep.mubr.f32.mxu0 %v44
    %1609 = vmatmul.mubr.f32.gmra.mrb[0].mxu0 %v43
    %v1610 = vpop.f32.mrb[0].mxu0
    %v1611 = vadd.f32 %v1541, %v1610
    %v1612 = vpop.f32.mrb[0].mxu0
    %1613 = vdwg.mxu0
    %1614 = vmatprep.subr.mxu0 0.0
    %1615 = vmatpush1.msra.mxu0 %v449
    %1616 = vmatprep.subr.mxu0 0.0
    %1617 = vmatpush1.msra.mxu0 %v450
    %1618 = vmatprep.subr.mxu0 0.0
    %1619 = vmatpush1.msra.mxu0 %v451
    %1620 = vmatprep.subr.mxu0 0.0
    %1621 = vmatpush1.msra.mxu0 %v452
    %1622 = vmatprep.subr.mxu0 0.0
    %1623 = vmatpush1.msra.mxu0 %v453
    %1624 = vmatprep.subr.mxu0 0.0
    %1625 = vmatpush1.msra.mxu0 %v454
    %1626 = vmatprep.subr.mxu0 0.0
    %1627 = vmatpush1.msra.mxu0 %v455
    %1628 = vmatprep.subr.mxu0 0.0
    %1629 = vmatpush1.msra.mxu0 %v456
    %1630 = vmatprep.subr.mxu0 0.0
    %1631 = vmatpush1.msra.mxu0 %v457
    %1632 = vmatprep.subr.mxu0 0.0
    %1633 = vmatpush1.msra.mxu0 %v458
    %1634 = vmatprep.subr.mxu0 0.0
    %1635 = vmatpush1.msra.mxu0 %v459
    %1636 = vmatprep.subr.mxu0 0.0
    %1637 = vmatpush1.msra.mxu0 %v460
    %1638 = vmatprep.subr.mxu0 0.0
    %1639 = vmatpush1.msra.mxu0 %v461
    %1640 = vmatprep.subr.mxu0 0.0
    %1641 = vmatpush1.msra.mxu0 %v462
    %1642 = vmatprep.subr.mxu0 0.0
    %1643 = vmatpush1.msra.mxu0 %v463
    %1644 = vmatprep.subr.mxu0 0.0
    %1645 = vmatpush1.msra.mxu0 %v464
    %1646 = vmatprep.subr.mxu0 0.0
    %1647 = vmatpush1.msra.mxu0 %v465
    %1648 = vmatprep.subr.mxu0 0.0
    %1649 = vmatpush1.msra.mxu0 %v466
    %1650 = vmatprep.subr.mxu0 0.0
    %1651 = vmatpush1.msra.mxu0 %v467
    %1652 = vmatprep.subr.mxu0 0.0
    %1653 = vmatpush1.msra.mxu0 %v468
    %1654 = vmatprep.subr.mxu0 0.0
    %1655 = vmatpush1.msra.mxu0 %v469
    %1656 = vmatprep.subr.mxu0 0.0
    %1657 = vmatpush1.msra.mxu0 %v470
    %1658 = vmatprep.subr.mxu0 0.0
    %1659 = vmatpush1.msra.mxu0 %v471
    %1660 = vmatprep.subr.mxu0 0.0
    %1661 = vmatpush1.msra.mxu0 %v472
    %1662 = vmatprep.subr.mxu0 0.0
    %1663 = vmatpush1.msra.mxu0 %v473
    %1664 = vmatprep.subr.mxu0 0.0
    %1665 = vmatpush1.msra.mxu0 %v474
    %1666 = vmatprep.subr.mxu0 0.0
    %1667 = vmatpush1.msra.mxu0 %v475
    %1668 = vmatprep.subr.mxu0 0.0
    %1669 = vmatpush1.msra.mxu0 %v476
    %1670 = vmatprep.subr.mxu0 0.0
    %1671 = vmatpush1.msra.mxu0 %v477
    %1672 = vmatprep.subr.mxu0 0.0
    %1673 = vmatpush1.msra.mxu0 %v478
    %1674 = vmatprep.subr.mxu0 0.0
    %1675 = vmatpush1.msra.mxu0 %v479
    %1676 = vmatprep.subr.mxu0 0.0
    %1677 = vmatpush1.msra.mxu0 %v480
    %1678 = vmatprep.mubr.f32.mxu0 %v46
    %1679 = vmatmul.mubr.f32.gmra.mrb[0].mxu0 %v45
    %v1680 = vpop.f32.mrb[0].mxu0
    %v1681 = vadd.f32 %v1611, %v1680
    %v1682 = vpop.f32.mrb[0].mxu0
    %1683 = vdwg.mxu0
    %1684 = vmatprep.subr.mxu0 0.0
    %1685 = vmatpush1.msra.mxu0 %v481
    %1686 = vmatprep.subr.mxu0 0.0
    %1687 = vmatpush1.msra.mxu0 %v482
    %1688 = vmatprep.subr.mxu0 0.0
    %1689 = vmatpush1.msra.mxu0 %v483
    %1690 = vmatprep.subr.mxu0 0.0
    %1691 = vmatpush1.msra.mxu0 %v484
    %1692 = vmatprep.subr.mxu0 0.0
    %1693 = vmatpush1.msra.mxu0 %v485
    %1694 = vmatprep.subr.mxu0 0.0
    %1695 = vmatpush1.msra.mxu0 %v486
    %1696 = vmatprep.subr.mxu0 0.0
    %1697 = vmatpush1.msra.mxu0 %v487
    %1698 = vmatprep.subr.mxu0 0.0
    %1699 = vmatpush1.msra.mxu0 %v488
    %1700 = vmatprep.subr.mxu0 0.0
    %1701 = vmatpush1.msra.mxu0 %v489
    %1702 = vmatprep.subr.mxu0 0.0
    %1703 = vmatpush1.msra.mxu0 %v490
    %1704 = vmatprep.subr.mxu0 0.0
    %1705 = vmatpush1.msra.mxu0 %v491
    %1706 = vmatprep.subr.mxu0 0.0
    %1707 = vmatpush1.msra.mxu0 %v492
    %1708 = vmatprep.subr.mxu0 0.0
    %1709 = vmatpush1.msra.mxu0 %v493
    %1710 = vmatprep.subr.mxu0 0.0
    %1711 = vmatpush1.msra.mxu0 %v494
    %1712 = vmatprep.subr.mxu0 0.0
    %1713 = vmatpush1.msra.mxu0 %v495
    %1714 = vmatprep.subr.mxu0 0.0
    %1715 = vmatpush1.msra.mxu0 %v496
    %1716 = vmatprep.subr.mxu0 0.0
    %1717 = vmatpush1.msra.mxu0 %v497
    %1718 = vmatprep.subr.mxu0 0.0
    %1719 = vmatpush1.msra.mxu0 %v498
    %1720 = vmatprep.subr.mxu0 0.0
    %1721 = vmatpush1.msra.mxu0 %v499
    %1722 = vmatprep.subr.mxu0 0.0
    %1723 = vmatpush1.msra.mxu0 %v500
    %1724 = vmatprep.subr.mxu0 0.0
    %1725 = vmatpush1.msra.mxu0 %v501
    %1726 = vmatprep.subr.mxu0 0.0
    %1727 = vmatpush1.msra.mxu0 %v502
    %1728 = vmatprep.subr.mxu0 0.0
    %1729 = vmatpush1.msra.mxu0 %v503
    %1730 = vmatprep.subr.mxu0 0.0
    %1731 = vmatpush1.msra.mxu0 %v504
    %1732 = vmatprep.subr.mxu0 0.0
    %1733 = vmatpush1.msra.mxu0 %v505
    %1734 = vmatprep.subr.mxu0 0.0
    %1735 = vmatpush1.msra.mxu0 %v506
    %1736 = vmatprep.subr.mxu0 0.0
    %1737 = vmatpush1.msra.mxu0 %v507
    %1738 = vmatprep.subr.mxu0 0.0
    %1739 = vmatpush1.msra.mxu0 %v508
    %1740 = vmatprep.subr.mxu0 0.0
    %1741 = vmatpush1.msra.mxu0 %v509
    %1742 = vmatprep.subr.mxu0 0.0
    %1743 = vmatpush1.msra.mxu0 %v510
    %1744 = vmatprep.subr.mxu0 0.0
    %1745 = vmatpush1.msra.mxu0 %v511
    %1746 = vmatprep.subr.mxu0 0.0
    %1747 = vmatpush1.msra.mxu0 %v512
    %1748 = vmatprep.mubr.f32.mxu0 %v48
    %1749 = vmatmul.mubr.f32.gmra.mrb[0].mxu0 %v47
    %v1750 = vpop.f32.mrb[0].mxu0
    %v1751 = vadd.f32 %v1681, %v1750
    %v1752 = vpop.f32.mrb[0].mxu0
    %1753 = vdwg.mxu0
    %1754 = vmatprep.subr.mxu0 0.0
    %1755 = vmatpush1.msra.mxu0 %v513
    %1756 = vmatprep.subr.mxu0 0.0
    %1757 = vmatpush1.msra.mxu0 %v514
    %1758 = vmatprep.subr.mxu0 0.0
    %1759 = vmatpush1.msra.mxu0 %v515
    %1760 = vmatprep.subr.mxu0 0.0
    %1761 = vmatpush1.msra.mxu0 %v516
    %1762 = vmatprep.subr.mxu0 0.0
    %1763 = vmatpush1.msra.mxu0 %v517
    %1764 = vmatprep.subr.mxu0 0.0
    %1765 = vmatpush1.msra.mxu0 %v518
    %1766 = vmatprep.subr.mxu0 0.0
    %1767 = vmatpush1.msra.mxu0 %v519
    %1768 = vmatprep.subr.mxu0 0.0
    %1769 = vmatpush1.msra.mxu0 %v520
    %1770 = vmatprep.subr.mxu0 0.0
    %1771 = vmatpush1.msra.mxu0 %v521
    %1772 = vmatprep.subr.mxu0 0.0
    %1773 = vmatpush1.msra.mxu0 %v522
    %1774 = vmatprep.subr.mxu0 0.0
    %1775 = vmatpush1.msra.mxu0 %v523
    %1776 = vmatprep.subr.mxu0 0.0
    %1777 = vmatpush1.msra.mxu0 %v524
    %1778 = vmatprep.subr.mxu0 0.0
    %1779 = vmatpush1.msra.mxu0 %v525
    %1780 = vmatprep.subr.mxu0 0.0
    %1781 = vmatpush1.msra.mxu0 %v526
    %1782 = vmatprep.subr.mxu0 0.0
    %1783 = vmatpush1.msra.mxu0 %v527
    %1784 = vmatprep.subr.mxu0 0.0
    %1785 = vmatpush1.msra.mxu0 %v528
    %1786 = vmatprep.subr.mxu0 0.0
    %1787 = vmatpush1.msra.mxu0 %v529
    %1788 = vmatprep.subr.mxu0 0.0
    %1789 = vmatpush1.msra.mxu0 %v530
    %1790 = vmatprep.subr.mxu0 0.0
    %1791 = vmatpush1.msra.mxu0 %v531
    %1792 = vmatprep.subr.mxu0 0.0
    %1793 = vmatpush1.msra.mxu0 %v532
    %1794 = vmatprep.subr.mxu0 0.0
    %1795 = vmatpush1.msra.mxu0 %v533
    %1796 = vmatprep.subr.mxu0 0.0
    %1797 = vmatpush1.msra.mxu0 %v534
    %1798 = vmatprep.subr.mxu0 0.0
    %1799 = vmatpush1.msra.mxu0 %v535
    %1800 = vmatprep.subr.mxu0 0.0
    %1801 = vmatpush1.msra.mxu0 %v536
    %1802 = vmatprep.subr.mxu0 0.0
    %1803 = vmatpush1.msra.mxu0 %v537
    %1804 = vmatprep.subr.mxu0 0.0
    %1805 = vmatpush1.msra.mxu0 %v538
    %1806 = vmatprep.subr.mxu0 0.0
    %1807 = vmatpush1.msra.mxu0 %v539
    %1808 = vmatprep.subr.mxu0 0.0
    %1809 = vmatpush1.msra.mxu0 %v540
    %1810 = vmatprep.subr.mxu0 0.0
    %1811 = vmatpush1.msra.mxu0 %v541
    %1812 = vmatprep.subr.mxu0 0.0
    %1813 = vmatpush1.msra.mxu0 %v542
    %1814 = vmatprep.subr.mxu0 0.0
    %1815 = vmatpush1.msra.mxu0 %v543
    %1816 = vmatprep.subr.mxu0 0.0
    %1817 = vmatpush1.msra.mxu0 %v544
    %1818 = vmatprep.mubr.f32.mxu0 %v50
    %1819 = vmatmul.mubr.f32.gmra.mrb[0].mxu0 %v49
    %v1820 = vpop.f32.mrb[0].mxu0
    %v1821 = vadd.f32 %v1751, %v1820
    %v1822 = vpop.f32.mrb[0].mxu0
    %1823 = vdwg.mxu0
    %1824 = vmatprep.subr.mxu0 0.0
    %1825 = vmatpush1.msra.mxu0 %v545
    %1826 = vmatprep.subr.mxu0 0.0
    %1827 = vmatpush1.msra.mxu0 %v546
    %1828 = vmatprep.subr.mxu0 0.0
    %1829 = vmatpush1.msra.mxu0 %v547
    %1830 = vmatprep.subr.mxu0 0.0
    %1831 = vmatpush1.msra.mxu0 %v548
    %1832 = vmatprep.subr.mxu0 0.0
    %1833 = vmatpush1.msra.mxu0 %v549
    %1834 = vmatprep.subr.mxu0 0.0
    %1835 = vmatpush1.msra.mxu0 %v550
    %1836 = vmatprep.subr.mxu0 0.0
    %1837 = vmatpush1.msra.mxu0 %v551
    %1838 = vmatprep.subr.mxu0 0.0
    %1839 = vmatpush1.msra.mxu0 %v552
    %1840 = vmatprep.subr.mxu0 0.0
    %1841 = vmatpush1.msra.mxu0 %v553
    %1842 = vmatprep.subr.mxu0 0.0
    %1843 = vmatpush1.msra.mxu0 %v554
    %1844 = vmatprep.subr.mxu0 0.0
    %1845 = vmatpush1.msra.mxu0 %v555
    %1846 = vmatprep.subr.mxu0 0.0
    %1847 = vmatpush1.msra.mxu0 %v556
    %1848 = vmatprep.subr.mxu0 0.0
    %1849 = vmatpush1.msra.mxu0 %v557
    %1850 = vmatprep.subr.mxu0 0.0
    %1851 = vmatpush1.msra.mxu0 %v558
    %1852 = vmatprep.subr.mxu0 0.0
    %1853 = vmatpush1.msra.mxu0 %v559
    %1854 = vmatprep.subr.mxu0 0.0
    %1855 = vmatpush1.msra.mxu0 %v560
    %1856 = vmatprep.subr.mxu0 0.0
    %1857 = vmatpush1.msra.mxu0 %v561
    %1858 = vmatprep.subr.mxu0 0.0
    %1859 = vmatpush1.msra.mxu0 %v562
    %1860 = vmatprep.subr.mxu0 0.0
    %1861 = vmatpush1.msra.mxu0 %v563
    %1862 = vmatprep.subr.mxu0 0.0
    %1863 = vmatpush1.msra.mxu0 %v564
    %1864 = vmatprep.subr.mxu0 0.0
    %1865 = vmatpush1.msra.mxu0 %v565
    %1866 = vmatprep.subr.mxu0 0.0
    %1867 = vmatpush1.msra.mxu0 %v566
    %1868 = vmatprep.subr.mxu0 0.0
    %1869 = vmatpush1.msra.mxu0 %v567
    %1870 = vmatprep.subr.mxu0 0.0
    %1871 = vmatpush1.msra.mxu0 %v568
    %1872 = vmatprep.subr.mxu0 0.0
    %1873 = vmatpush1.msra.mxu0 %v569
    %1874 = vmatprep.subr.mxu0 0.0
    %1875 = vmatpush1.msra.mxu0 %v570
    %1876 = vmatprep.subr.mxu0 0.0
    %1877 = vmatpush1.msra.mxu0 %v571
    %1878 = vmatprep.subr.mxu0 0.0
    %1879 = vmatpush1.msra.mxu0 %v572
    %1880 = vmatprep.subr.mxu0 0.0
    %1881 = vmatpush1.msra.mxu0 %v573
    %1882 = vmatprep.subr.mxu0 0.0
    %1883 = vmatpush1.msra.mxu0 %v574
    %1884 = vmatprep.subr.mxu0 0.0
    %1885 = vmatpush1.msra.mxu0 %v575
    %1886 = vmatprep.subr.mxu0 0.0
    %1887 = vmatpush1.msra.mxu0 %v576
    %1888 = vmatprep.mubr.f32.mxu0 %v52
    %1889 = vmatmul.mubr.f32.gmra.mrb[0].mxu0 %v51
    %v1890 = vpop.f32.mrb[0].mxu0
    %v1891 = vadd.f32 %v1821, %v1890
    %v1892 = vpop.f32.mrb[0].mxu0
    %1893 = vdwg.mxu0
    %1894 = vmatprep.subr.mxu0 0.0
    %1895 = vmatpush1.msra.mxu0 %v577
    %1896 = vmatprep.subr.mxu0 0.0
    %1897 = vmatpush1.msra.mxu0 %v578
    %1898 = vmatprep.subr.mxu0 0.0
    %1899 = vmatpush1.msra.mxu0 %v579
    %1900 = vmatprep.subr.mxu0 0.0
    %1901 = vmatpush1.msra.mxu0 %v580
    %1902 = vmatprep.subr.mxu0 0.0
    %1903 = vmatpush1.msra.mxu0 %v581
    %1904 = vmatprep.subr.mxu0 0.0
    %1905 = vmatpush1.msra.mxu0 %v582
    %1906 = vmatprep.subr.mxu0 0.0
    %1907 = vmatpush1.msra.mxu0 %v583
    %1908 = vmatprep.subr.mxu0 0.0
    %1909 = vmatpush1.msra.mxu0 %v584
    %1910 = vmatprep.subr.mxu0 0.0
    %1911 = vmatpush1.msra.mxu0 %v585
    %1912 = vmatprep.subr.mxu0 0.0
    %1913 = vmatpush1.msra.mxu0 %v586
    %1914 = vmatprep.subr.mxu0 0.0
    %1915 = vmatpush1.msra.mxu0 %v587
    %1916 = vmatprep.subr.mxu0 0.0
    %1917 = vmatpush1.msra.mxu0 %v588
    %1918 = vmatprep.subr.mxu0 0.0
    %1919 = vmatpush1.msra.mxu0 %v589
    %1920 = vmatprep.subr.mxu0 0.0
    %1921 = vmatpush1.msra.mxu0 %v590
    %1922 = vmatprep.subr.mxu0 0.0
    %1923 = vmatpush1.msra.mxu0 %v591
    %1924 = vmatprep.subr.mxu0 0.0
    %1925 = vmatpush1.msra.mxu0 %v592
    %1926 = vmatprep.subr.mxu0 0.0
    %1927 = vmatpush1.msra.mxu0 %v593
    %1928 = vmatprep.subr.mxu0 0.0
    %1929 = vmatpush1.msra.mxu0 %v594
    %1930 = vmatprep.subr.mxu0 0.0
    %1931 = vmatpush1.msra.mxu0 %v595
    %1932 = vmatprep.subr.mxu0 0.0
    %1933 = vmatpush1.msra.mxu0 %v596
    %1934 = vmatprep.subr.mxu0 0.0
    %1935 = vmatpush1.msra.mxu0 %v597
    %1936 = vmatprep.subr.mxu0 0.0
    %1937 = vmatpush1.msra.mxu0 %v598
    %1938 = vmatprep.subr.mxu0 0.0
    %1939 = vmatpush1.msra.mxu0 %v599
    %1940 = vmatprep.subr.mxu0 0.0
    %1941 = vmatpush1.msra.mxu0 %v600
    %1942 = vmatprep.subr.mxu0 0.0
    %1943 = vmatpush1.msra.mxu0 %v601
    %1944 = vmatprep.subr.mxu0 0.0
    %1945 = vmatpush1.msra.mxu0 %v602
    %1946 = vmatprep.subr.mxu0 0.0
    %1947 = vmatpush1.msra.mxu0 %v603
    %1948 = vmatprep.subr.mxu0 0.0
    %1949 = vmatpush1.msra.mxu0 %v604
    %1950 = vmatprep.subr.mxu0 0.0
    %1951 = vmatpush1.msra.mxu0 %v605
    %1952 = vmatprep.subr.mxu0 0.0
    %1953 = vmatpush1.msra.mxu0 %v606
    %1954 = vmatprep.subr.mxu0 0.0
    %1955 = vmatpush1.msra.mxu0 %v607
    %1956 = vmatprep.subr.mxu0 0.0
    %1957 = vmatpush1.msra.mxu0 %v608
    %1958 = vmatprep.mubr.f32.mxu0 %v54
    %1959 = vmatmul.mubr.f32.gmra.mrb[0].mxu0 %v53
    %v1960 = vpop.f32.mrb[0].mxu0
    %v1961 = vadd.f32 %v1891, %v1960
    %v1962 = vpop.f32.mrb[0].mxu0
    %1963 = vdwg.mxu0
    %1964 = vmatprep.subr.mxu0 0.0
    %1965 = vmatpush1.msra.mxu0 %v609
    %1966 = vmatprep.subr.mxu0 0.0
    %1967 = vmatpush1.msra.mxu0 %v610
    %1968 = vmatprep.subr.mxu0 0.0
    %1969 = vmatpush1.msra.mxu0 %v611
    %1970 = vmatprep.subr.mxu0 0.0
    %1971 = vmatpush1.msra.mxu0 %v612
    %1972 = vmatprep.subr.mxu0 0.0
    %1973 = vmatpush1.msra.mxu0 %v613
    %1974 = vmatprep.subr.mxu0 0.0
    %1975 = vmatpush1.msra.mxu0 %v614
    %1976 = vmatprep.subr.mxu0 0.0
    %1977 = vmatpush1.msra.mxu0 %v615
    %1978 = vmatprep.subr.mxu0 0.0
    %1979 = vmatpush1.msra.mxu0 %v616
    %1980 = vmatprep.subr.mxu0 0.0
    %1981 = vmatpush1.msra.mxu0 %v617
    %1982 = vmatprep.subr.mxu0 0.0
    %1983 = vmatpush1.msra.mxu0 %v618
    %1984 = vmatprep.subr.mxu0 0.0
    %1985 = vmatpush1.msra.mxu0 %v619
    %1986 = vmatprep.subr.mxu0 0.0
    %1987 = vmatpush1.msra.mxu0 %v620
    %1988 = vmatprep.subr.mxu0 0.0
    %1989 = vmatpush1.msra.mxu0 %v621
    %1990 = vmatprep.subr.mxu0 0.0
    %1991 = vmatpush1.msra.mxu0 %v622
    %1992 = vmatprep.subr.mxu0 0.0
    %1993 = vmatpush1.msra.mxu0 %v623
    %1994 = vmatprep.subr.mxu0 0.0
    %1995 = vmatpush1.msra.mxu0 %v624
    %1996 = vmatprep.subr.mxu0 0.0
    %1997 = vmatpush1.msra.mxu0 %v625
    %1998 = vmatprep.subr.mxu0 0.0
    %1999 = vmatpush1.msra.mxu0 %v626
    %2000 = vmatprep.subr.mxu0 0.0
    %2001 = vmatpush1.msra.mxu0 %v627
    %2002 = vmatprep.subr.mxu0 0.0
    %2003 = vmatpush1.msra.mxu0 %v628
    %2004 = vmatprep.subr.mxu0 0.0
    %2005 = vmatpush1.msra.mxu0 %v629
    %2006 = vmatprep.subr.mxu0 0.0
    %2007 = vmatpush1.msra.mxu0 %v630
    %2008 = vmatprep.subr.mxu0 0.0
    %2009 = vmatpush1.msra.mxu0 %v631
    %2010 = vmatprep.subr.mxu0 0.0
    %2011 = vmatpush1.msra.mxu0 %v632
    %2012 = vmatprep.subr.mxu0 0.0
    %2013 = vmatpush1.msra.mxu0 %v633
    %2014 = vmatprep.subr.mxu0 0.0
    %2015 = vmatpush1.msra.mxu0 %v634
    %2016 = vmatprep.subr.mxu0 0.0
    %2017 = vmatpush1.msra.mxu0 %v635
    %2018 = vmatprep.subr.mxu0 0.0
    %2019 = vmatpush1.msra.mxu0 %v636
    %2020 = vmatprep.subr.mxu0 0.0
    %2021 = vmatpush1.msra.mxu0 %v637
    %2022 = vmatprep.subr.mxu0 0.0
    %2023 = vmatpush1.msra.mxu0 %v638
    %2024 = vmatprep.subr.mxu0 0.0
    %2025 = vmatpush1.msra.mxu0 %v639
    %2026 = vmatprep.subr.mxu0 0.0
    %2027 = vmatpush1.msra.mxu0 %v640
    %2028 = vmatprep.mubr.f32.mxu0 %v56
    %2029 = vmatmul.mubr.f32.gmra.mrb[0].mxu0 %v55
    %v2030 = vpop.f32.mrb[0].mxu0
    %v2031 = vadd.f32 %v1961, %v2030
    %v2032 = vpop.f32.mrb[0].mxu0
    %2033 = vdwg.mxu0
    %2034 = vmatprep.subr.mxu0 0.0
    %2035 = vmatpush1.msra.mxu0 %v641
    %2036 = vmatprep.subr.mxu0 0.0
    %2037 = vmatpush1.msra.mxu0 %v642
    %2038 = vmatprep.subr.mxu0 0.0
    %2039 = vmatpush1.msra.mxu0 %v643
    %2040 = vmatprep.subr.mxu0 0.0
    %2041 = vmatpush1.msra.mxu0 %v644
    %2042 = vmatprep.subr.mxu0 0.0
    %2043 = vmatpush1.msra.mxu0 %v645
    %2044 = vmatprep.subr.mxu0 0.0
    %2045 = vmatpush1.msra.mxu0 %v646
    %2046 = vmatprep.subr.mxu0 0.0
    %2047 = vmatpush1.msra.mxu0 %v647
    %2048 = vmatprep.subr.mxu0 0.0
    %2049 = vmatpush1.msra.mxu0 %v648
    %2050 = vmatprep.subr.mxu0 0.0
    %2051 = vmatpush1.msra.mxu0 %v649
    %2052 = vmatprep.subr.mxu0 0.0
    %2053 = vmatpush1.msra.mxu0 %v650
    %2054 = vmatprep.subr.mxu0 0.0
    %2055 = vmatpush1.msra.mxu0 %v651
    %2056 = vmatprep.subr.mxu0 0.0
    %2057 = vmatpush1.msra.mxu0 %v652
    %2058 = vmatprep.subr.mxu0 0.0
    %2059 = vmatpush1.msra.mxu0 %v653
    %2060 = vmatprep.subr.mxu0 0.0
    %2061 = vmatpush1.msra.mxu0 %v654
    %2062 = vmatprep.subr.mxu0 0.0
    %2063 = vmatpush1.msra.mxu0 %v655
    %2064 = vmatprep.subr.mxu0 0.0
    %2065 = vmatpush1.msra.mxu0 %v656
    %2066 = vmatprep.subr.mxu0 0.0
    %2067 = vmatpush1.msra.mxu0 %v657
    %2068 = vmatprep.subr.mxu0 0.0
    %2069 = vmatpush1.msra.mxu0 %v658
    %2070 = vmatprep.subr.mxu0 0.0
    %2071 = vmatpush1.msra.mxu0 %v659
    %2072 = vmatprep.subr.mxu0 0.0
    %2073 = vmatpush1.msra.mxu0 %v660
    %2074 = vmatprep.subr.mxu0 0.0
    %2075 = vmatpush1.msra.mxu0 %v661
    %2076 = vmatprep.subr.mxu0 0.0
    %2077 = vmatpush1.msra.mxu0 %v662
    %2078 = vmatprep.subr.mxu0 0.0
    %2079 = vmatpush1.msra.mxu0 %v663
    %2080 = vmatprep.subr.mxu0 0.0
    %2081 = vmatpush1.msra.mxu0 %v664
    %2082 = vmatprep.subr.mxu0 0.0
    %2083 = vmatpush1.msra.mxu0 %v665
    %2084 = vmatprep.subr.mxu0 0.0
    %2085 = vmatpush1.msra.mxu0 %v666
    %2086 = vmatprep.subr.mxu0 0.0
    %2087 = vmatpush1.msra.mxu0 %v667
    %2088 = vmatprep.subr.mxu0 0.0
    %2089 = vmatpush1.msra.mxu0 %v668
    %2090 = vmatprep.subr.mxu0 0.0
    %2091 = vmatpush1.msra.mxu0 %v669
    %2092 = vmatprep.subr.mxu0 0.0
    %2093 = vmatpush1.msra.mxu0 %v670
    %2094 = vmatprep.subr.mxu0 0.0
    %2095 = vmatpush1.msra.mxu0 %v671
    %2096 = vmatprep.subr.mxu0 0.0
    %2097 = vmatpush1.msra.mxu0 %v672
    %2098 = vmatprep.mubr.f32.mxu0 %v58
    %2099 = vmatmul.mubr.f32.gmra.mrb[0].mxu0 %v57
    %v2100 = vpop.f32.mrb[0].mxu0
    %v2101 = vadd.f32 %v2031, %v2100
    %v2102 = vpop.f32.mrb[0].mxu0
    %2103 = vdwg.mxu0
    %2104 = vmatprep.subr.mxu0 0.0
    %2105 = vmatpush1.msra.mxu0 %v673
    %2106 = vmatprep.subr.mxu0 0.0
    %2107 = vmatpush1.msra.mxu0 %v674
    %2108 = vmatprep.subr.mxu0 0.0
    %2109 = vmatpush1.msra.mxu0 %v675
    %2110 = vmatprep.subr.mxu0 0.0
    %2111 = vmatpush1.msra.mxu0 %v676
    %2112 = vmatprep.subr.mxu0 0.0
    %2113 = vmatpush1.msra.mxu0 %v677
    %2114 = vmatprep.subr.mxu0 0.0
    %2115 = vmatpush1.msra.mxu0 %v678
    %2116 = vmatprep.subr.mxu0 0.0
    %2117 = vmatpush1.msra.mxu0 %v679
    %2118 = vmatprep.subr.mxu0 0.0
    %2119 = vmatpush1.msra.mxu0 %v680
    %2120 = vmatprep.subr.mxu0 0.0
    %2121 = vmatpush1.msra.mxu0 %v681
    %2122 = vmatprep.subr.mxu0 0.0
    %2123 = vmatpush1.msra.mxu0 %v682
    %2124 = vmatprep.subr.mxu0 0.0
    %2125 = vmatpush1.msra.mxu0 %v683
    %2126 = vmatprep.subr.mxu0 0.0
    %2127 = vmatpush1.msra.mxu0 %v684
    %2128 = vmatprep.subr.mxu0 0.0
    %2129 = vmatpush1.msra.mxu0 %v685
    %2130 = vmatprep.subr.mxu0 0.0
    %2131 = vmatpush1.msra.mxu0 %v686
    %2132 = vmatprep.subr.mxu0 0.0
    %2133 = vmatpush1.msra.mxu0 %v687
    %2134 = vmatprep.subr.mxu0 0.0
    %2135 = vmatpush1.msra.mxu0 %v688
    %2136 = vmatprep.subr.mxu0 0.0
    %2137 = vmatpush1.msra.mxu0 %v689
    %2138 = vmatprep.subr.mxu0 0.0
    %2139 = vmatpush1.msra.mxu0 %v690
    %2140 = vmatprep.subr.mxu0 0.0
    %2141 = vmatpush1.msra.mxu0 %v691
    %2142 = vmatprep.subr.mxu0 0.0
    %2143 = vmatpush1.msra.mxu0 %v692
    %2144 = vmatprep.subr.mxu0 0.0
    %2145 = vmatpush1.msra.mxu0 %v693
    %2146 = vmatprep.subr.mxu0 0.0
    %2147 = vmatpush1.msra.mxu0 %v694
    %2148 = vmatprep.subr.mxu0 0.0
    %2149 = vmatpush1.msra.mxu0 %v695
    %2150 = vmatprep.subr.mxu0 0.0
    %2151 = vmatpush1.msra.mxu0 %v696
    %2152 = vmatprep.subr.mxu0 0.0
    %2153 = vmatpush1.msra.mxu0 %v697
    %2154 = vmatprep.subr.mxu0 0.0
    %2155 = vmatpush1.msra.mxu0 %v698
    %2156 = vmatprep.subr.mxu0 0.0
    %2157 = vmatpush1.msra.mxu0 %v699
    %2158 = vmatprep.subr.mxu0 0.0
    %2159 = vmatpush1.msra.mxu0 %v700
    %2160 = vmatprep.subr.mxu0 0.0
    %2161 = vmatpush1.msra.mxu0 %v701
    %2162 = vmatprep.subr.mxu0 0.0
    %2163 = vmatpush1.msra.mxu0 %v702
    %2164 = vmatprep.subr.mxu0 0.0
    %2165 = vmatpush1.msra.mxu0 %v703
    %2166 = vmatprep.subr.mxu0 0.0
    %2167 = vmatpush1.msra.mxu0 %v704
    %2168 = vmatprep.mubr.f32.mxu0 %v60
    %2169 = vmatmul.mubr.f32.gmra.mrb[0].mxu0 %v59
    %v2170 = vpop.f32.mrb[0].mxu0
    %v2171 = vadd.f32 %v2101, %v2170
    %v2172 = vpop.f32.mrb[0].mxu0
    %2173 = vdwg.mxu0
    %2174 = vmatprep.subr.mxu0 0.0
    %2175 = vmatpush1.msra.mxu0 %v705
    %2176 = vmatprep.subr.mxu0 0.0
    %2177 = vmatpush1.msra.mxu0 %v706
    %2178 = vmatprep.subr.mxu0 0.0
    %2179 = vmatpush1.msra.mxu0 %v707
    %2180 = vmatprep.subr.mxu0 0.0
    %2181 = vmatpush1.msra.mxu0 %v708
    %2182 = vmatprep.subr.mxu0 0.0
    %2183 = vmatpush1.msra.mxu0 %v709
    %2184 = vmatprep.subr.mxu0 0.0
    %2185 = vmatpush1.msra.mxu0 %v710
    %2186 = vmatprep.subr.mxu0 0.0
    %2187 = vmatpush1.msra.mxu0 %v711
    %2188 = vmatprep.subr.mxu0 0.0
    %2189 = vmatpush1.msra.mxu0 %v712
    %2190 = vmatprep.subr.mxu0 0.0
    %2191 = vmatpush1.msra.mxu0 %v713
    %2192 = vmatprep.subr.mxu0 0.0
    %2193 = vmatpush1.msra.mxu0 %v714
    %2194 = vmatprep.subr.mxu0 0.0
    %2195 = vmatpush1.msra.mxu0 %v715
    %2196 = vmatprep.subr.mxu0 0.0
    %2197 = vmatpush1.msra.mxu0 %v716
    %2198 = vmatprep.subr.mxu0 0.0
    %2199 = vmatpush1.msra.mxu0 %v717
    %2200 = vmatprep.subr.mxu0 0.0
    %2201 = vmatpush1.msra.mxu0 %v718
    %2202 = vmatprep.subr.mxu0 0.0
    %2203 = vmatpush1.msra.mxu0 %v719
    %2204 = vmatprep.subr.mxu0 0.0
    %2205 = vmatpush1.msra.mxu0 %v720
    %2206 = vmatprep.subr.mxu0 0.0
    %2207 = vmatpush1.msra.mxu0 %v721
    %2208 = vmatprep.subr.mxu0 0.0
    %2209 = vmatpush1.msra.mxu0 %v722
    %2210 = vmatprep.subr.mxu0 0.0
    %2211 = vmatpush1.msra.mxu0 %v723
    %2212 = vmatprep.subr.mxu0 0.0
    %2213 = vmatpush1.msra.mxu0 %v724
    %2214 = vmatprep.subr.mxu0 0.0
    %2215 = vmatpush1.msra.mxu0 %v725
    %2216 = vmatprep.subr.mxu0 0.0
    %2217 = vmatpush1.msra.mxu0 %v726
    %2218 = vmatprep.subr.mxu0 0.0
    %2219 = vmatpush1.msra.mxu0 %v727
    %2220 = vmatprep.subr.mxu0 0.0
    %2221 = vmatpush1.msra.mxu0 %v728
    %2222 = vmatprep.subr.mxu0 0.0
    %2223 = vmatpush1.msra.mxu0 %v729
    %2224 = vmatprep.subr.mxu0 0.0
    %2225 = vmatpush1.msra.mxu0 %v730
    %2226 = vmatprep.subr.mxu0 0.0
    %2227 = vmatpush1.msra.mxu0 %v731
    %2228 = vmatprep.subr.mxu0 0.0
    %2229 = vmatpush1.msra.mxu0 %v732
    %2230 = vmatprep.subr.mxu0 0.0
    %2231 = vmatpush1.msra.mxu0 %v733
    %2232 = vmatprep.subr.mxu0 0.0
    %2233 = vmatpush1.msra.mxu0 %v734
    %2234 = vmatprep.subr.mxu0 0.0
    %2235 = vmatpush1.msra.mxu0 %v735
    %2236 = vmatprep.subr.mxu0 0.0
    %2237 = vmatpush1.msra.mxu0 %v736
    %2238 = vmatprep.mubr.f32.mxu0 %v62
    %2239 = vmatmul.mubr.f32.gmra.mrb[0].mxu0 %v61
    %v2240 = vpop.f32.mrb[0].mxu0
    %v2241 = vadd.f32 %v2171, %v2240
    %v2242 = vpop.f32.mrb[0].mxu0
    %2243 = vdwg.mxu0
    %2244 = vmatprep.subr.mxu0 0.0
    %2245 = vmatpush1.msra.mxu0 %v737
    %2246 = vmatprep.subr.mxu0 0.0
    %2247 = vmatpush1.msra.mxu0 %v738
    %2248 = vmatprep.subr.mxu0 0.0
    %2249 = vmatpush1.msra.mxu0 %v739
    %2250 = vmatprep.subr.mxu0 0.0
    %2251 = vmatpush1.msra.mxu0 %v740
    %2252 = vmatprep.subr.mxu0 0.0
    %2253 = vmatpush1.msra.mxu0 %v741
    %2254 = vmatprep.subr.mxu0 0.0
    %2255 = vmatpush1.msra.mxu0 %v742
    %2256 = vmatprep.subr.mxu0 0.0
    %2257 = vmatpush1.msra.mxu0 %v743
    %2258 = vmatprep.subr.mxu0 0.0
    %2259 = vmatpush1.msra.mxu0 %v744
    %2260 = vmatprep.subr.mxu0 0.0
    %2261 = vmatpush1.msra.mxu0 %v745
    %2262 = vmatprep.subr.mxu0 0.0
    %2263 = vmatpush1.msra.mxu0 %v746
    %2264 = vmatprep.subr.mxu0 0.0
    %2265 = vmatpush1.msra.mxu0 %v747
    %2266 = vmatprep.subr.mxu0 0.0
    %2267 = vmatpush1.msra.mxu0 %v748
    %2268 = vmatprep.subr.mxu0 0.0
    %2269 = vmatpush1.msra.mxu0 %v749
    %2270 = vmatprep.subr.mxu0 0.0
    %2271 = vmatpush1.msra.mxu0 %v750
    %2272 = vmatprep.subr.mxu0 0.0
    %2273 = vmatpush1.msra.mxu0 %v751
    %2274 = vmatprep.subr.mxu0 0.0
    %2275 = vmatpush1.msra.mxu0 %v752
    %2276 = vmatprep.subr.mxu0 0.0
    %2277 = vmatpush1.msra.mxu0 %v753
    %2278 = vmatprep.subr.mxu0 0.0
    %2279 = vmatpush1.msra.mxu0 %v754
    %2280 = vmatprep.subr.mxu0 0.0
    %2281 = vmatpush1.msra.mxu0 %v755
    %2282 = vmatprep.subr.mxu0 0.0
    %2283 = vmatpush1.msra.mxu0 %v756
    %2284 = vmatprep.subr.mxu0 0.0
    %2285 = vmatpush1.msra.mxu0 %v757
    %2286 = vmatprep.subr.mxu0 0.0
    %2287 = vmatpush1.msra.mxu0 %v772
    %2288 = vmatprep.subr.mxu0 0.0
    %2289 = vmatpush1.msra.mxu0 0.0
    %2290 = vmatprep.subr.mxu0 0.0
    %2291 = vmatpush1.msra.mxu0 0.0
    %2292 = vmatprep.subr.mxu0 0.0
    %2293 = vmatpush1.msra.mxu0 0.0
    %2294 = vmatprep.subr.mxu0 0.0
    %2295 = vmatpush1.msra.mxu0 0.0
    %2296 = vmatprep.subr.mxu0 0.0
    %2297 = vmatpush1.msra.mxu0 0.0
    %2298 = vmatprep.subr.mxu0 0.0
    %2299 = vmatpush1.msra.mxu0 0.0
    %2300 = vmatprep.subr.mxu0 0.0
    %2301 = vmatpush1.msra.mxu0 0.0
    %2302 = vmatprep.subr.mxu0 0.0
    %2303 = vmatpush1.msra.mxu0 0.0
    %2304 = vmatprep.subr.mxu0 0.0
    %2305 = vmatpush1.msra.mxu0 0.0
    %2306 = vmatprep.subr.mxu0 0.0
    %2307 = vmatpush1.msra.mxu0 0.0
    %2308 = vmatprep.mubr.f32.mxu0 %v768
    %2309 = vmatmul.mubr.f32.gmra.mrb[0].mxu0 %v63
    %v2310 = vpop.f32.mrb[0].mxu0
    %v2311 = vadd.f32 %v2241, %v2310
    %v2312 = vpop.f32.mrb[0].mxu0
    %2313 = vdwg.mxu0
    %v2314 = vmax.f32 %v2311, 0.0
    %v2315 = vld [vmem:[%s3] sm:$0xff]
    %v2316 = vld [vmem:[%s3 + $0x8] sm:$0xff]
    %v2317 = vld [vmem:[%s3 + $0x10] sm:$0xff]
    %v2318 = vld [vmem:[%s3 + $0x18] sm:$0x1]
    %v2319 = vld [vmem:[%s4] sm:$0x1]
    %v2321 = vlaneseq
    %v2322 = vshrl.u32 %v2321, 7
    %v2323 = vsub.s32 0, %v2322
    %v2324 = vrot.slane %v2319, %v2323
    %vm2326 = vcmask 203776
    %v2328 = vsel %vm2326, %v2314, 0
    %vm2330 = vcmask 1040384
    %v2332 = vsel %vm2330, %v2318, 0
    %2334 = vmatprep.subr.mxu0 0.0
    %2335 = vmatpush1.msra.mxu0 %v2315
    %2336 = vmatprep.subr.mxu0 0.0
    %2337 = vmatpush1.msra.mxu0 %v2316
    %2338 = vmatprep.subr.mxu0 0.0
    %2339 = vmatpush1.msra.mxu0 %v2317
    %2340 = vmatprep.subr.mxu0 0.0
    %2341 = vmatpush1.msra.mxu0 %v2332
    %2342 = vmatprep.subr.mxu0 0.0
    %2343 = vmatpush1.msra.mxu0 0.0
    %2344 = vmatprep.subr.mxu0 0.0
    %2345 = vmatpush1.msra.mxu0 0.0
    %2346 = vmatprep.subr.mxu0 0.0
    %2347 = vmatpush1.msra.mxu0 0.0
    %2348 = vmatprep.subr.mxu0 0.0
    %2349 = vmatpush1.msra.mxu0 0.0
    %2350 = vmatprep.subr.mxu0 0.0
    %2351 = vmatpush1.msra.mxu0 0.0
    %2352 = vmatprep.subr.mxu0 0.0
    %2353 = vmatpush1.msra.mxu0 0.0
    %2354 = vmatprep.subr.mxu0 0.0
    %2355 = vmatpush1.msra.mxu0 0.0
    %2356 = vmatprep.subr.mxu0 0.0
    %2357 = vmatpush1.msra.mxu0 0.0
    %2358 = vmatprep.subr.mxu0 0.0
    %2359 = vmatpush1.msra.mxu0 0.0
    %2360 = vmatprep.subr.mxu0 0.0
    %2361 = vmatpush1.msra.mxu0 0.0
    %2362 = vmatprep.subr.mxu0 0.0
    %2363 = vmatpush1.msra.mxu0 0.0
    %2364 = vmatprep.subr.mxu0 0.0
    %2365 = vmatpush1.msra.mxu0 0.0
    %2366 = vmatprep.subr.mxu0 0.0
    %2367 = vmatpush1.msra.mxu0 0.0
    %2368 = vmatprep.subr.mxu0 0.0
    %2369 = vmatpush1.msra.mxu0 0.0
    %2370 = vmatprep.subr.mxu0 0.0
    %2371 = vmatpush1.msra.mxu0 0.0
    %2372 = vmatprep.subr.mxu0 0.0
    %2373 = vmatpush1.msra.mxu0 0.0
    %2374 = vmatprep.subr.mxu0 0.0
    %2375 = vmatpush1.msra.mxu0 0.0
    %2376 = vmatprep.subr.mxu0 0.0
    %2377 = vmatpush1.msra.mxu0 0.0
    %2378 = vmatprep.subr.mxu0 0.0
    %2379 = vmatpush1.msra.mxu0 0.0
    %2380 = vmatprep.subr.mxu0 0.0
    %2381 = vmatpush1.msra.mxu0 0.0
    %2382 = vmatprep.subr.mxu0 0.0
    %2383 = vmatpush1.msra.mxu0 0.0
    %2384 = vmatprep.subr.mxu0 0.0
    %2385 = vmatpush1.msra.mxu0 0.0
    %2386 = vmatprep.subr.mxu0 0.0
    %2387 = vmatpush1.msra.mxu0 0.0
    %2388 = vmatprep.subr.mxu0 0.0
    %2389 = vmatpush1.msra.mxu0 0.0
    %2390 = vmatprep.subr.mxu0 0.0
    %2391 = vmatpush1.msra.mxu0 0.0
    %2392 = vmatprep.subr.mxu0 0.0
    %2393 = vmatpush1.msra.mxu0 0.0
    %2394 = vmatprep.subr.mxu0 0.0
    %2395 = vmatpush1.msra.mxu0 0.0
    %2396 = vmatprep.subr.mxu0 0.0
    %2397 = vmatpush1.msra.mxu0 0.0
    %2398 = vmatprep.mubr.f32.mxu0 0.0
    %2399 = vmatmul.mubr.f32.gmra.mrb[0].mxu0 %v2328
    %v2400 = vpop.f32.mrb[0].mxu0
    %v2401 = vadd.f32 %v2324, %v2400
    %v2402 = vpop.f32.mrb[0].mxu0
    %2403 = vdwg.mxu0
    %vm2404 = vcmask 39936
    %2405 = vst.msk [vmem:[#allocation2] sm:$0xff] %vm2404, %v2401
    // Predicated region
    $region22: #{model_gnome_forward.1} parent=1 // pred_check
      _
    $region23: #{model_gnome_forward.1} parent=1 // pred_check_branch
      %2407 = sbr.rel (0) target = $region25
    $region24: #{model_gnome_forward.1} parent=1 // pred_region
      %s2409 = ssub.s32 128, 128
      %2410 = vsyncadd [#allocation3], %s2409
      %s2412 = sshll.u32 [#allocation2], 4
      %s2413 = int_to_ptr.vmem [resolvable:$true] %s2412
      %2415 = dma.vmem_to_hbm [thread:$0]  %s2413, 128, %s5, [#allocation3]
    $region25: #{model_gnome_forward.1} parent=1 // pred_fallthru
      _
    // Predicated region
    $region26: #{model_gnome_forward.1} parent=1 // pred_check
      _
    $region27: #{model_gnome_forward.1} parent=1 // pred_check_branch
      %2417 = sbr.rel (0) target = $region29
    $region28: #{model_gnome_forward.1} parent=1 // pred_region
      %2418 = dma.done [#allocation3], 128
    $region29: #{model_gnome_forward.1} parent=1 // pred_fallthru
      _
    %2419 = vsyncpa [#allocation3], 1

</llo_original>
